<compile_context>
chip_gen: v6e
topology: v6e:2x2x1
jax: 0.10.0
libtpu: 0.0.40
codegen_flags: <defaults>
</compile_context>

<pallas_src>
import functools

import numpy as np
import jax
import jax.numpy as jnp
from jax import lax
from jax.experimental import pallas as pl
from jax.experimental.pallas import tpu as pltpu

COMPUTE_DTYPE = jnp.bfloat16          # MXU operand dtype; accumulation is f32
_VMEM_LIMIT = 32 * 1024 * 1024        # above the 16 MiB v5e default, safe on v7x


def _round_up(x, m):
    return (x + m - 1) // m * m


# ---------------------------------------------------------------------------
# Kernels
# ---------------------------------------------------------------------------
def _stacked_conv(src_load, w_ref, m_ref, xs_ref, *, Kr, Kc, Cin, Cout, Wd, HW,
                  full_cols):
    """Kr x Kc tap convolution as Kc MXU matmuls with a (Kr*Cin)-deep contraction.

    src_load(start, size) returns a (Cin, size) contiguous lane slice of the
    row-padded + flattened source.  xs_ref is a (Kr*Cin, HW+Kc-1) VMEM staging
    buffer holding the row-stacked RHS.
    """
    stage = HW + Kc - 1
    for ki in range(Kr):
        xs_ref[ki * Cin:(ki + 1) * Cin, :] = src_load(ki * Wd, stage)
    acc = jnp.zeros((Cout, HW), jnp.float32)
    for kj in range(Kc):
        d = jnp.dot(w_ref[kj], xs_ref[:, kj:kj + HW],
                    preferred_element_type=jnp.float32)
        acc = acc + (d if full_cols[kj] else d * m_ref[kj:kj + 1, :])
    return acc


def _conv_kernel(x_ref, w_ref, m_ref, o_ref, xs_ref, *,
                 Kr, Kc, Cin, Wd, HW, act, full_cols):
    """x_ref: (1, Cin, L) flattened input; w_ref: (Kc, Cout, Kr*Cin);
    m_ref: (Kc, HW) column-validity mask; o_ref: (1, Cout, HW)."""
    acc = _stacked_conv(lambda s, n: x_ref[0, :, s:s + n], w_ref, m_ref, xs_ref,
                        Kr=Kr, Kc=Kc, Cin=Cin, Cout=o_ref.shape[1],
                        Wd=Wd, HW=HW, full_cols=full_cols)
    if act == "relu":
        out = jnp.maximum(acc, 0.0)
    elif act == "sigmoid":
        out = jax.nn.sigmoid(acc)
    else:
        out = acc
    o_ref[0] = out.astype(o_ref.dtype)


def _resblock_kernel(x_ref, w1_ref, w2_ref, m_ref, o_ref, t_ref, xs_ref, *,
                     Kr, Kc, C, Wd, HW, off, full_cols):
    """Fused ResBlock: out = relu(t + conv2(t)), t = relu(conv1(x)).
    The intermediate t stays in the (C, L) VMEM scratch t_ref."""
    # conv1 + ReLU -> t (never leaves VMEM)
    acc1 = _stacked_conv(lambda s, n: x_ref[0, :, s:s + n], w1_ref, m_ref, xs_ref,
                         Kr=Kr, Kc=Kc, Cin=C, Cout=C, Wd=Wd, HW=HW,
                         full_cols=full_cols)
    t = jnp.maximum(acc1, 0.0)
    # lay t out in the same row-padded flattened layout so conv2's taps are
    # contiguous lane slices again (pad regions stay zero)
    t_ref[...] = jnp.zeros(t_ref.shape, t_ref.dtype)
    t_ref[:, off:off + HW] = t.astype(t_ref.dtype)
    # conv2 + residual add + ReLU
    acc2 = _stacked_conv(lambda s, n: t_ref[:, s:s + n], w2_ref, m_ref, xs_ref,
                         Kr=Kr, Kc=Kc, Cin=C, Cout=C, Wd=Wd, HW=HW,
                         full_cols=full_cols)
    out = jnp.maximum(acc2 + t, 0.0)
    o_ref[0] = out.astype(o_ref.dtype)


# ---------------------------------------------------------------------------
# Wrapper helpers (layout plumbing done in the XLA wrapper, not the kernel)
# ---------------------------------------------------------------------------
def _column_mask(Hout, Wout, Kc, Pcol):
    ow = np.arange(Wout)
    m = np.zeros((Kc, Hout * Wout), np.float32)
    full = []
    for kj in range(Kc):
        valid = ((ow + kj - Pcol) >= 0) & ((ow + kj - Pcol) < Wout)
        m[kj] = np.tile(valid.astype(np.float32), Hout)
        full.append(bool(valid.all()))
    return jnp.asarray(m), tuple(full)


def _flatten_rows(x, pad_top, pad_bot, Pcol, Kc):
    """(N, C, H, W) -> (N, C, L) row-padded flat layout in which tap (ki, kj)
    of output pixel (r, c) is the contiguous lane slice starting at ki*W+kj."""
    x = jnp.pad(x, ((0, 0), (0, 0), (pad_top, pad_bot), (0, 0)))
    N, C, R, W = x.shape
    xf = x.reshape(N, C, R * W)
    return jnp.pad(xf, ((0, 0), (0, 0), (Pcol, Kc - 1 - Pcol)))


def _conv_call(xflat, wpacked, mask, full_cols, Hout, Wout, Kr, Kc, act,
               out_dtype):
    N, Cin, L = xflat.shape
    _, Cout, KrCin = wpacked.shape
    HW = Hout * Wout
    kern = functools.partial(_conv_kernel, Kr=Kr, Kc=Kc, Cin=Cin, Wd=Wout,
                             HW=HW, act=act, full_cols=full_cols)
    return pl.pallas_call(
        kern,
        out_shape=jax.ShapeDtypeStruct((N, Cout, HW), out_dtype),
        grid_spec=pltpu.PrefetchScalarGridSpec(
            num_scalar_prefetch=0,
            grid=(N,),
            in_specs=[
                pl.BlockSpec((1, Cin, L), lambda n: (n, 0, 0)),
                pl.BlockSpec((Kc, Cout, KrCin), lambda n: (0, 0, 0)),
                pl.BlockSpec((Kc, HW), lambda n: (0, 0)),
            ],
            out_specs=pl.BlockSpec((1, Cout, HW), lambda n: (n, 0, 0)),
            scratch_shapes=[pltpu.VMEM((KrCin, HW + Kc - 1), COMPUTE_DTYPE)],
        ),
        compiler_params=pltpu.CompilerParams(
            dimension_semantics=("parallel",),
            vmem_limit_bytes=_VMEM_LIMIT),
    )(xflat, wpacked, mask)


# ---------------------------------------------------------------------------
# Layer wrappers (bias-free, matching use_bias=False for BatchNorm default)
# ---------------------------------------------------------------------------
def conv5x5(x, wpacked, act="relu", out_dtype=None):
    """nn.Conv2d(Cin, Cout, 5, padding=2, bias=False) with fused activation."""
    N, C, H, W = x.shape
    K, P = 5, 2
    Cin_p = wpacked.shape[2] // K
    x = x.astype(COMPUTE_DTYPE)
    if Cin_p != C:                        # first layer: Cin=3 zero-padded to 16
        x = jnp.pad(x, ((0, 0), (0, Cin_p - C), (0, 0), (0, 0)))
    xflat = _flatten_rows(x, P, K - 1 - P, P, K)
    mask, full_cols = _column_mask(H, W, K, P)
    out = _conv_call(xflat, wpacked, mask, full_cols, H, W, K, K, act,
                     out_dtype if out_dtype is not None else COMPUTE_DTYPE)
    return out.reshape(N, -1, H, W)


def conv5x5_stride2(x, wpacked, act="relu"):
    """nn.Conv2d(Cin, Cout, 5, padding=2, stride=2, bias=False): phase-decomposed
    into an equivalent 3x3 stride-1 conv over 4*Cin channels."""
    N, C, H, W = x.shape
    assert H % 2 == 0 and W % 2 == 0, "stride-2 path needs even H, W"
    Hout, Wout = H // 2, W // 2
    K, P = 3, 1
    x = x.astype(COMPUTE_DTYPE)
    xr = jnp.pad(x, ((0, 0), (0, 0), (2, 2), (0, 0)))
    phases = [xr[:, :, p::2, q::2] for p in range(2) for q in range(2)]
    xph = jnp.concatenate(phases, axis=1)              # (N, 4C, Hout+2, Wout)
    xflat = _flatten_rows(xph, 0, 0, P, K)             # rows already padded
    mask, full_cols = _column_mask(Hout, Wout, K, P)
    out = _conv_call(xflat, wpacked, mask, full_cols, Hout, Wout, K, K, act,
                     COMPUTE_DTYPE)
    return out.reshape(N, -1, Hout, Wout)


def conv_transpose4x4(x, wphases, act="none"):
    """nn.ConvTranspose2d(Cin, Cout, 4, stride=2, padding=1, bias=False),
    decomposed into 4 output phases, each a 2x2 stride-1 conv over the
    *undilated* input, interleaved in the wrapper."""
    del act  # no activation after the deconvs in this network
    N, C, H, W = x.shape
    x = x.astype(COMPUTE_DTYPE)
    Cout = wphases[(0, 0)].shape[1]
    out = jnp.zeros((N, Cout, 2 * H, 2 * W), COMPUTE_DTYPE)
    for p in (0, 1):
        pad_top, pad_bot = (1, 0) if p == 0 else (0, 1)
        for q in (0, 1):
            Pcol = 1 if q == 0 else 0
            xflat = _flatten_rows(x, pad_top, pad_bot, Pcol, 2)
            mask, full_cols = _column_mask(H, W, 2, Pcol)
            y = _conv_call(xflat, wphases[(p, q)], mask, full_cols, H, W, 2, 2,
                           "none", COMPUTE_DTYPE)
            out = out.at[:, :, p::2, q::2].set(y.reshape(N, Cout, H, W))
    return out


def res_block(x, wpair):
    """Fused PyTorch ResBlock (relu is in-place, so the residual is the ReLU'd
    conv1 output): out = relu(t + conv2(t)), t = relu(conv1(x)).
    One pallas_call; t never hits HBM."""
    w1p, w2p = wpair
    N, C, H, W = x.shape
    K, P = 5, 2
    HW = H * W
    x = x.astype(COMPUTE_DTYPE)
    xflat = _flatten_rows(x, P, K - 1 - P, P, K)
    L = xflat.shape[-1]
    mask, full_cols = _column_mask(H, W, K, P)
    kern = functools.partial(_resblock_kernel, Kr=K, Kc=K, C=C, Wd=W, HW=HW,
                             off=P * W + P, full_cols=full_cols)
    out = pl.pallas_call(
        kern,
        out_shape=jax.ShapeDtypeStruct((N, C, HW), COMPUTE_DTYPE),
        grid_spec=pltpu.PrefetchScalarGridSpec(
            num_scalar_prefetch=0,
            grid=(N,),
            in_specs=[
                pl.BlockSpec((1, C, L), lambda n: (n, 0, 0)),
                pl.BlockSpec((K, C, K * C), lambda n: (0, 0, 0)),
                pl.BlockSpec((K, C, K * C), lambda n: (0, 0, 0)),
                pl.BlockSpec((K, HW), lambda n: (0, 0)),
            ],
            out_specs=pl.BlockSpec((1, C, HW), lambda n: (n, 0, 0)),
            scratch_shapes=[pltpu.VMEM((C, L), COMPUTE_DTYPE),
                            pltpu.VMEM((K * C, HW + K - 1), COMPUTE_DTYPE)],
        ),
        compiler_params=pltpu.CompilerParams(
            dimension_semantics=("parallel",),
            vmem_limit_bytes=_VMEM_LIMIT),
    )(xflat, w1p, w2p, mask)
    return out.reshape(N, C, H, W)


# ---------------------------------------------------------------------------
# One-time host-side weight repacking (hoisted out of the jitted forward)
# ---------------------------------------------------------------------------
def _pack_taps(w_oikk):
    """(Cout, Cin, Kr, Kc) -> (Kc, Cout, Kr*Cin) stacked-contraction layout."""
    w = np.asarray(w_oikk, np.float32)
    Cout, Cin, Kr, Kc = w.shape
    wt = np.transpose(w, (3, 0, 2, 1)).reshape(Kc, Cout, Kr * Cin)
    return jnp.asarray(wt, COMPUTE_DTYPE)


def pack_conv5x5(w):
    """OIHW 5x5 weight; Cin zero-padded to a multiple of 16 (bf16 sublane pack)."""
    w = np.asarray(w, np.float32)
    Cout, Cin = w.shape[:2]
    Cin_p = _round_up(Cin, 16)
    if Cin_p != Cin:
        w = np.pad(w, ((0, 0), (0, Cin_p - Cin), (0, 0), (0, 0)))
    return _pack_taps(w)


def pack_conv5x5_stride2(w):
    """OIHW 5x5 stride-2 weight -> 3x3 weight over 4*Cin phase channels."""
    w = np.asarray(w, np.float32)
    Cout, Cin = w.shape[:2]
    w3 = np.zeros((Cout, 4 * Cin, 3, 3), np.float32)
    for p in range(2):
        for q in range(2):
            f = p * 2 + q
            for ka in range(3):
                for kb in range(3):
                    ki, kj = 2 * ka + p, 2 * kb + q
                    if ki < 5 and kj < 5:
                        w3[:, f * Cin:(f + 1) * Cin, ka, kb] = w[:, :, ki, kj]
    return _pack_taps(w3)


def pack_deconv4x4(w):
    """(Cin, Cout, 4, 4) ConvTranspose weight -> {(p, q): packed 2x2 conv weight}."""
    w = np.asarray(w, np.float32)
    Cin, Cout = w.shape[:2]
    tab = {0: (3, 1), 1: (2, 0)}       # phase -> kernel index for tap offset 0, 1
    out = {}
    for p in range(2):
        for q in range(2):
            wp = np.zeros((Cout, Cin, 2, 2), np.float32)
            for a in range(2):
                for b in range(2):
                    wp[:, :, a, b] = w[:, :, tab[p][a], tab[q][b]].T
            out[(p, q)] = _pack_taps(wp)
    return out


_CONV5 = ("G_conv1", "G_conv2", "G_conv3", "G_conv4", "G_deconv1_0")
_CONV5_S2 = ("G_conv2_0", "G_conv3_0", "G_conv4_0")
_DECONV = ("G_deconv4_0", "G_deconv3_0", "G_deconv2_0")


def prepare_params(raw):
    packed = {}
    for name, val in raw.items():
        if name in _CONV5:
            packed[name] = pack_conv5x5(val)
        elif name in _CONV5_S2:
            packed[name] = pack_conv5x5_stride2(val)
        elif name in _DECONV:
            packed[name] = pack_deconv4x4(val)
        else:                              # ResBlock: (w1, w2)
            packed[name] = (pack_conv5x5(val[0]), pack_conv5x5(val[1]))
    return packed


# ---------------------------------------------------------------------------
# Full Encode_Decode forward (shared structure for Pallas and reference paths)
# ---------------------------------------------------------------------------
def _network(x, p, conv, conv_s2, convT, res):
    x = conv(x, p["G_conv1"], "relu")
    for n in ("G_conv1_1", "G_conv1_2", "G_conv1_3"):
        x = res(x, p[n])
    x = conv_s2(x, p["G_conv2_0"], "relu")
    x = conv(x, p["G_conv2"], "relu")
    for n in ("G_conv2_1", "G_conv2_2", "G_conv2_3"):
        x = res(x, p[n])
    x = conv_s2(x, p["G_conv3_0"], "relu")
    x = conv(x, p["G_conv3"], "relu")
    for n in ("G_conv3_1", "G_conv3_2", "G_conv3_3"):
        x = res(x, p[n])
    x = conv_s2(x, p["G_conv4_0"], "relu")
    x = conv(x, p["G_conv4"], "relu")
    for n in ("G_conv4_1", "G_conv4_2", "G_conv4_3",
              "G_deconv4_3", "G_deconv4_2", "G_deconv4_1"):
        x = res(x, p[n])
    x = convT(x, p["G_deconv4_0"])
    for n in ("G_deconv3_3", "G_deconv3_2", "G_deconv3_1"):
        x = res(x, p[n])
    x = convT(x, p["G_deconv3_0"])
    for n in ("G_deconv2_3", "G_deconv2_2", "G_deconv2_1"):
        x = res(x, p[n])
    x = convT(x, p["G_deconv2_0"])
    for n in ("G_deconv1_3", "G_deconv1_2", "G_deconv1_1"):
        x = res(x, p[n])
    x = conv(x, p["G_deconv1_0"], "sigmoid")
    return x


def encode_decode_pallas(x, packed):
    def conv(x, w, act):
        return conv5x5(x, w, act,
                       out_dtype=jnp.float32 if act == "sigmoid" else None)
    return _network(x, packed, conv, conv5x5_stride2, conv_transpose4x4,
                    res_block)


# ---------------------------------------------------------------------------
# Pure-JAX f32 reference (lax convolutions) for correctness checking
# ---------------------------------------------------------------------------
def _conv_ref(x, w, stride=1, pad=2):
    return lax.conv_general_dilated(
        x, w, (stride, stride), ((pad, pad), (pad, pad)),
        dimension_numbers=("NCHW", "OIHW", "NCHW"),
        precision=lax.Precision.HIGHEST)


def _convT_ref(x, w):
    wf = jnp.transpose(w[:, :, ::-1, ::-1], (1, 0, 2, 3))   # (Cout, Cin, 4, 4)
    return lax.conv_general_dilated(
        x, wf, (1, 1), ((2, 2), (2, 2)), lhs_dilation=(2, 2),
        dimension_numbers=("NCHW", "OIHW", "NCHW"),
        precision=lax.Precision.HIGHEST)


def _res_block_ref(x, wpair):
    w1, w2 = wpair
    t = jax.nn.relu(_conv_ref(x, w1))
    return jax.nn.relu(t + _conv_ref(t, w2))


def encode_decode_ref(x, raw):
    def conv(x, w, act):
        y = _conv_ref(x, w)
        if act == "relu":
            return jax.nn.relu(y)
        if act == "sigmoid":
            return jax.nn.sigmoid(y)
        return y

    def conv_s2(x, w, act):
        return jax.nn.relu(_conv_ref(x, w, stride=2))

    def convT(x, w):
        return _convT_ref(x, w)

    return _network(x, raw, conv, conv_s2, convT, _res_block_ref)


# ---------------------------------------------------------------------------
# Parameter construction (raw PyTorch-layout f32 weights)
# ---------------------------------------------------------------------------
def init_params(key):
    p = {}
    keys = [key]

    def nk():
        keys[0], sub = jax.random.split(keys[0])
        return sub

    def conv_w(cout, cin, k=5):
        std = 1.0 / np.sqrt(cin * k * k)
        return jax.random.normal(nk(), (cout, cin, k, k), jnp.float32) * std

    def convT_w(cin, cout, k=4):
        std = 1.0 / np.sqrt(cin * k * k)
        return jax.random.normal(nk(), (cin, cout, k, k), jnp.float32) * std

    def res_w(c):
        return (conv_w(c, c), conv_w(c, c))

    p["G_conv1"] = conv_w(32, 3)
    for n in ("G_conv1_1", "G_conv1_2", "G_conv1_3"):
        p[n] = res_w(32)
    p["G_conv2_0"] = conv_w(64, 32)
    p["G_conv2"] = conv_w(64, 64)
    for n in ("G_conv2_1", "G_conv2_2", "G_conv2_3"):
        p[n] = res_w(64)
    p["G_conv3_0"] = conv_w(64, 64)
    p["G_conv3"] = conv_w(64, 64)
    for n in ("G_conv3_1", "G_conv3_2", "G_conv3_3"):
        p[n] = res_w(64)
    p["G_conv4_0"] = conv_w(128, 64)
    p["G_conv4"] = conv_w(128, 128)
    for n in ("G_conv4_1", "G_conv4_2", "G_conv4_3",
              "G_deconv4_3", "G_deconv4_2", "G_deconv4_1"):
        p[n] = res_w(128)
    p["G_deconv4_0"] = convT_w(128, 64)
    for n in ("G_deconv3_3", "G_deconv3_2", "G_deconv3_1"):
        p[n] = res_w(64)
    p["G_deconv3_0"] = convT_w(64, 64)
    for n in ("G_deconv2_3", "G_deconv2_2", "G_deconv2_1"):
        p[n] = res_w(64)
    p["G_deconv2_0"] = convT_w(64, 32)
    for n in ("G_deconv1_3", "G_deconv1_2", "G_deconv1_1"):
        p[n] = res_w(32)
    p["G_deconv1_0"] = conv_w(3, 32)
    return p


# ---------------------------------------------------------------------------
# Unit checks of each layer primitive (bf16-rounded operands vs f32 lax ref)
# ---------------------------------------------------------------------------
def _b(x):
    return x.astype(jnp.bfloat16).astype(jnp.float32)


def _check_units(key):
    k1, k2, k3, k4, k5, k6, k7 = jax.random.split(key, 7)
    rtol = atol = 1.5e-2   # covers bf16 operand rounding + bf16 output store

    xa = jax.random.normal(k1, (2, 32, 16, 16), jnp.float32)
    wa = jax.random.normal(k2, (32, 32, 5, 5), jnp.float32) * 0.04
    got = conv5x5(xa, pack_conv5x5(wa), "relu").astype(jnp.float32)
    ref = jax.nn.relu(_conv_ref(_b(xa), _b(wa)))
    np.testing.assert_allclose(np.asarray(got), np.asarray(ref),
                               rtol=rtol, atol=atol)

    # Cin=3 path (channel padding to 16)
    xc = jax.random.normal(k1, (2, 3, 16, 16), jnp.float32)
    wc = jax.random.normal(k2, (32, 3, 5, 5), jnp.float32) * 0.1
    got = conv5x5(xc, pack_conv5x5(wc), "relu").astype(jnp.float32)
    ref = jax.nn.relu(_conv_ref(_b(xc), _b(wc)))
    np.testing.assert_allclose(np.asarray(got), np.asarray(ref),
                               rtol=rtol, atol=atol)

    ws = jax.random.normal(k3, (64, 32, 5, 5), jnp.float32) * 0.04
    got = conv5x5_stride2(xa, pack_conv5x5_stride2(ws), "relu").astype(jnp.float32)
    ref = jax.nn.relu(_conv_ref(_b(xa), _b(ws), stride=2))
    np.testing.assert_allclose(np.asarray(got), np.asarray(ref),
                               rtol=rtol, atol=atol)

    xb = jax.random.normal(k4, (2, 64, 8, 8), jnp.float32)
    wtp = jax.random.normal(k5, (64, 32, 4, 4), jnp.float32) * 0.03
    got = conv_transpose4x4(xb, pack_deconv4x4(wtp)).astype(jnp.float32)
    ref = _convT_ref(_b(xb), _b(wtp))
    np.testing.assert_allclose(np.asarray(got), np.asarray(ref),
                               rtol=rtol, atol=atol)

    w1 = jax.random.normal(k6, (32, 32, 5, 5), jnp.float32) * 0.04
    w2 = jax.random.normal(k7, (32, 32, 5, 5), jnp.float32) * 0.04
    got = res_block(xa, (pack_conv5x5(w1), pack_conv5x5(w2))).astype(jnp.float32)
    t = jax.nn.relu(_conv_ref(_b(xa), _b(w1)))
    ref = jax.nn.relu(t + _conv_ref(_b(t), _b(w2)))
    np.testing.assert_allclose(np.asarray(got), np.asarray(ref),
                               rtol=rtol, atol=atol)


# ---------------------------------------------------------------------------
if __name__ == "__main__":
    key = jax.random.PRNGKey(0)
    kx, kp, ku = jax.random.split(key, 3)

    N, H, W = 2, 16, 16
    x = jax.random.normal(kx, (N, 3, H, W), dtype=jnp.float32)
    raw_params = init_params(kp)
    packed_params = prepare_params(raw_params)   # one-time host-side repack

    # Building-block correctness checks (Pallas vs lax reference).
    _check_units(ku)

    # Full Encode_Decode forward pass.
    fwd = jax.jit(encode_decode_pallas)
    out = jax.block_until_ready(fwd(x, packed_params))
    assert out.shape == (N, 3, H, W), out.shape

    ref = jax.block_until_ready(jax.jit(encode_decode_ref)(x, raw_params))
    np.testing.assert_allclose(np.asarray(out), np.asarray(ref),
                               rtol=2e-2, atol=2e-2)
    print("KERNEL_OK")
</pallas_src>

<mosaic_0001>
module attributes {stable_mosaic.version = 11 : i64} {
  func.func @_conv_kernel(%arg0: i32, %arg1: memref<1x32x324xbf16, #tpu.memory_space<vmem>>, %arg2: memref<5x32x160xbf16, #tpu.memory_space<vmem>>, %arg3: memref<5x256xf32, #tpu.memory_space<vmem>>, %arg4: memref<1x32x256xbf16, #tpu.memory_space<vmem>>, %arg5: memref<160x260xbf16, #tpu.memory_space<vmem>>) attributes {dimension_semantics = [#tpu.dimension_semantics<parallel>], iteration_bounds = array<i64: 2>, scalar_prefetch = 0 : i64, scratch_operands = 1 : i64, tpu.core_type = #tpu.core_type<tc>, window_params = [{transform_indices = @transform_0, window_bounds = array<i64: 1, 32, 324>}, {pipeline_mode = #tpu.pipeline_mode<synchronous>, transform_indices = @transform_1, window_bounds = array<i64: 5, 32, 160>}, {pipeline_mode = #tpu.pipeline_mode<synchronous>, transform_indices = @transform_2, window_bounds = array<i64: 5, 256>}, {transform_indices = @transform_3, window_bounds = array<i64: 1, 32, 256>}]} {
    %c0 = arith.constant 0 : index
    %c0_0 = arith.constant 0 : index
    %c0_1 = arith.constant 0 : index
    %0 = vector.load %arg1[%c0, %c0_0, %c0_1] : memref<1x32x324xbf16, #tpu.memory_space<vmem>>, vector<1x32x260xbf16>
    %1 = vector.shape_cast %0 : vector<1x32x260xbf16> to vector<32x260xbf16>
    %c0_2 = arith.constant 0 : index
    %c0_3 = arith.constant 0 : index
    %2 = vector.load %arg5[%c0_2, %c0_3] : memref<160x260xbf16, #tpu.memory_space<vmem>>, vector<32x260xbf16>
    tpu.vector_store %arg5[%c0_2, %c0_3], %1 {strides = array<i32>} : memref<160x260xbf16, #tpu.memory_space<vmem>>, vector<32x260xbf16>,
    %c0_4 = arith.constant 0 : index
    %c0_5 = arith.constant 0 : index
    %c16 = arith.constant 16 : index
    %3 = vector.load %arg1[%c0_4, %c0_5, %c16] : memref<1x32x324xbf16, #tpu.memory_space<vmem>>, vector<1x32x260xbf16>
    %4 = vector.shape_cast %3 : vector<1x32x260xbf16> to vector<32x260xbf16>
    %c32 = arith.constant 32 : index
    %c0_6 = arith.constant 0 : index
    %5 = vector.load %arg5[%c32, %c0_6] : memref<160x260xbf16, #tpu.memory_space<vmem>>, vector<32x260xbf16>
    tpu.vector_store %arg5[%c32, %c0_6], %4 {strides = array<i32>} : memref<160x260xbf16, #tpu.memory_space<vmem>>, vector<32x260xbf16>,
    %c0_7 = arith.constant 0 : index
    %c0_8 = arith.constant 0 : index
    %c32_9 = arith.constant 32 : index
    %6 = vector.load %arg1[%c0_7, %c0_8, %c32_9] : memref<1x32x324xbf16, #tpu.memory_space<vmem>>, vector<1x32x260xbf16>
    %7 = vector.shape_cast %6 : vector<1x32x260xbf16> to vector<32x260xbf16>
    %c64 = arith.constant 64 : index
    %c0_10 = arith.constant 0 : index
    %8 = vector.load %arg5[%c64, %c0_10] : memref<160x260xbf16, #tpu.memory_space<vmem>>, vector<32x260xbf16>
    tpu.vector_store %arg5[%c64, %c0_10], %7 {strides = array<i32>} : memref<160x260xbf16, #tpu.memory_space<vmem>>, vector<32x260xbf16>,
    %c0_11 = arith.constant 0 : index
    %c0_12 = arith.constant 0 : index
    %c48 = arith.constant 48 : index
    %9 = vector.load %arg1[%c0_11, %c0_12, %c48] : memref<1x32x324xbf16, #tpu.memory_space<vmem>>, vector<1x32x260xbf16>
    %10 = vector.shape_cast %9 : vector<1x32x260xbf16> to vector<32x260xbf16>
    %c96 = arith.constant 96 : index
    %c0_13 = arith.constant 0 : index
    %11 = vector.load %arg5[%c96, %c0_13] : memref<160x260xbf16, #tpu.memory_space<vmem>>, vector<32x260xbf16>
    tpu.vector_store %arg5[%c96, %c0_13], %10 {strides = array<i32>} : memref<160x260xbf16, #tpu.memory_space<vmem>>, vector<32x260xbf16>,
    %c0_14 = arith.constant 0 : index
    %c0_15 = arith.constant 0 : index
    %c64_16 = arith.constant 64 : index
    %12 = vector.load %arg1[%c0_14, %c0_15, %c64_16] : memref<1x32x324xbf16, #tpu.memory_space<vmem>>, vector<1x32x260xbf16>
    %13 = vector.shape_cast %12 : vector<1x32x260xbf16> to vector<32x260xbf16>
    %c128 = arith.constant 128 : index
    %c0_17 = arith.constant 0 : index
    %14 = vector.load %arg5[%c128, %c0_17] : memref<160x260xbf16, #tpu.memory_space<vmem>>, vector<32x260xbf16>
    tpu.vector_store %arg5[%c128, %c0_17], %13 {strides = array<i32>} : memref<160x260xbf16, #tpu.memory_space<vmem>>, vector<32x260xbf16>,
    %cst = arith.constant 0.000000e+00 : f32
    %15 = vector.broadcast %cst : f32 to vector<32x256xf32>
    %c0_18 = arith.constant 0 : index
    %c0_19 = arith.constant 0 : index
    %c0_20 = arith.constant 0 : index
    %16 = vector.load %arg2[%c0_18, %c0_19, %c0_20] : memref<5x32x160xbf16, #tpu.memory_space<vmem>>, vector<1x32x160xbf16>
    %17 = vector.shape_cast %16 : vector<1x32x160xbf16> to vector<32x160xbf16>
    %c0_21 = arith.constant 0 : index
    %c0_22 = arith.constant 0 : index
    %18 = vector.load %arg5[%c0_21, %c0_22] : memref<160x260xbf16, #tpu.memory_space<vmem>>, vector<160x256xbf16>
    %cst_23 = arith.constant dense<0.000000e+00> : vector<32x256xf32>
    %19 = tpu.matmul %17, %18, %cst_23 {dimension_numbers = #tpu.dot_dimension_numbers<[1], [0], [0], [1], [0, 0, 1, 1], [], []>} : vector<32x160xbf16>, vector<160x256xbf16>, vector<32x256xf32> -> vector<32x256xf32>
    %c0_24 = arith.constant 0 : index
    %c0_25 = arith.constant 0 : index
    %20 = vector.load %arg3[%c0_24, %c0_25] : memref<5x256xf32, #tpu.memory_space<vmem>>, vector<1x256xf32>
    %21 = vector.broadcast %20 : vector<1x256xf32> to vector<32x256xf32>
    %22 = arith.mulf %19, %21 : vector<32x256xf32>
    %23 = arith.addf %15, %22 : vector<32x256xf32>
    %c1 = arith.constant 1 : index
    %c0_26 = arith.constant 0 : index
    %c0_27 = arith.constant 0 : index
    %24 = vector.load %arg2[%c1, %c0_26, %c0_27] : memref<5x32x160xbf16, #tpu.memory_space<vmem>>, vector<1x32x160xbf16>
    %25 = vector.shape_cast %24 : vector<1x32x160xbf16> to vector<32x160xbf16>
    %c0_28 = arith.constant 0 : index
    %c1_29 = arith.constant 1 : index
    %26 = vector.load %arg5[%c0_28, %c1_29] : memref<160x260xbf16, #tpu.memory_space<vmem>>, vector<160x256xbf16>
    %cst_30 = arith.constant dense<0.000000e+00> : vector<32x256xf32>
    %27 = tpu.matmul %25, %26, %cst_30 {dimension_numbers = #tpu.dot_dimension_numbers<[1], [0], [0], [1], [0, 0, 1, 1], [], []>} : vector<32x160xbf16>, vector<160x256xbf16>, vector<32x256xf32> -> vector<32x256xf32>
    %c1_31 = arith.constant 1 : index
    %c0_32 = arith.constant 0 : index
    %28 = vector.load %arg3[%c1_31, %c0_32] : memref<5x256xf32, #tpu.memory_space<vmem>>, vector<1x256xf32>
    %29 = vector.broadcast %28 : vector<1x256xf32> to vector<32x256xf32>
    %30 = arith.mulf %27, %29 : vector<32x256xf32>
    %31 = arith.addf %23, %30 : vector<32x256xf32>
    %c2 = arith.constant 2 : index
    %c0_33 = arith.constant 0 : index
    %c0_34 = arith.constant 0 : index
    %32 = vector.load %arg2[%c2, %c0_33, %c0_34] : memref<5x32x160xbf16, #tpu.memory_space<vmem>>, vector<1x32x160xbf16>
    %33 = vector.shape_cast %32 : vector<1x32x160xbf16> to vector<32x160xbf16>
    %c0_35 = arith.constant 0 : index
    %c2_36 = arith.constant 2 : index
    %34 = vector.load %arg5[%c0_35, %c2_36] : memref<160x260xbf16, #tpu.memory_space<vmem>>, vector<160x256xbf16>
    %cst_37 = arith.constant dense<0.000000e+00> : vector<32x256xf32>
    %35 = tpu.matmul %33, %34, %cst_37 {dimension_numbers = #tpu.dot_dimension_numbers<[1], [0], [0], [1], [0, 0, 1, 1], [], []>} : vector<32x160xbf16>, vector<160x256xbf16>, vector<32x256xf32> -> vector<32x256xf32>
    %36 = arith.addf %31, %35 : vector<32x256xf32>
    %c3 = arith.constant 3 : index
    %c0_38 = arith.constant 0 : index
    %c0_39 = arith.constant 0 : index
    %37 = vector.load %arg2[%c3, %c0_38, %c0_39] : memref<5x32x160xbf16, #tpu.memory_space<vmem>>, vector<1x32x160xbf16>
    %38 = vector.shape_cast %37 : vector<1x32x160xbf16> to vector<32x160xbf16>
    %c0_40 = arith.constant 0 : index
    %c3_41 = arith.constant 3 : index
    %39 = vector.load %arg5[%c0_40, %c3_41] : memref<160x260xbf16, #tpu.memory_space<vmem>>, vector<160x256xbf16>
    %cst_42 = arith.constant dense<0.000000e+00> : vector<32x256xf32>
    %40 = tpu.matmul %38, %39, %cst_42 {dimension_numbers = #tpu.dot_dimension_numbers<[1], [0], [0], [1], [0, 0, 1, 1], [], []>} : vector<32x160xbf16>, vector<160x256xbf16>, vector<32x256xf32> -> vector<32x256xf32>
    %c3_43 = arith.constant 3 : index
    %c0_44 = arith.constant 0 : index
    %41 = vector.load %arg3[%c3_43, %c0_44] : memref<5x256xf32, #tpu.memory_space<vmem>>, vector<1x256xf32>
    %42 = vector.broadcast %41 : vector<1x256xf32> to vector<32x256xf32>
    %43 = arith.mulf %40, %42 : vector<32x256xf32>
    %44 = arith.addf %36, %43 : vector<32x256xf32>
    %c4 = arith.constant 4 : index
    %c0_45 = arith.constant 0 : index
    %c0_46 = arith.constant 0 : index
    %45 = vector.load %arg2[%c4, %c0_45, %c0_46] : memref<5x32x160xbf16, #tpu.memory_space<vmem>>, vector<1x32x160xbf16>
    %46 = vector.shape_cast %45 : vector<1x32x160xbf16> to vector<32x160xbf16>
    %c0_47 = arith.constant 0 : index
    %c4_48 = arith.constant 4 : index
    %47 = vector.load %arg5[%c0_47, %c4_48] : memref<160x260xbf16, #tpu.memory_space<vmem>>, vector<160x256xbf16>
    %cst_49 = arith.constant dense<0.000000e+00> : vector<32x256xf32>
    %48 = tpu.matmul %46, %47, %cst_49 {dimension_numbers = #tpu.dot_dimension_numbers<[1], [0], [0], [1], [0, 0, 1, 1], [], []>} : vector<32x160xbf16>, vector<160x256xbf16>, vector<32x256xf32> -> vector<32x256xf32>
    %c4_50 = arith.constant 4 : index
    %c0_51 = arith.constant 0 : index
    %49 = vector.load %arg3[%c4_50, %c0_51] : memref<5x256xf32, #tpu.memory_space<vmem>>, vector<1x256xf32>
    %50 = vector.broadcast %49 : vector<1x256xf32> to vector<32x256xf32>
    %51 = arith.mulf %48, %50 : vector<32x256xf32>
    %52 = arith.addf %44, %51 : vector<32x256xf32>
    %cst_52 = arith.constant 0.000000e+00 : f32
    %53 = vector.broadcast %cst_52 : f32 to vector<32x256xf32>
    %54 = arith.maximumf %52, %53 : vector<32x256xf32>
    %55 = arith.truncf %54 : vector<32x256xf32> to vector<32x256xbf16>
    %c0_53 = arith.constant 0 : index
    %c0_54 = arith.constant 0 : index
    %c0_55 = arith.constant 0 : index
    %56 = vector.load %arg4[%c0_53, %c0_54, %c0_55] : memref<1x32x256xbf16, #tpu.memory_space<vmem>>, vector<1x32x256xbf16>
    %57 = vector.shape_cast %56 : vector<1x32x256xbf16> to vector<32x256xbf16>
    %58 = vector.shape_cast %55 : vector<32x256xbf16> to vector<1x32x256xbf16>
    tpu.vector_store %arg4[%c0_53, %c0_54, %c0_55], %58 {strides = array<i32>} : memref<1x32x256xbf16, #tpu.memory_space<vmem>>, vector<1x32x256xbf16>,
    return
  }
  func.func @transform_0(%arg0: i32) -> (i32, i32, i32) {
    %c0_i32 = arith.constant 0 : i32
    %c0_i32_0 = arith.constant 0 : i32
    %c0_i32_1 = arith.constant 0 : i32
    return %arg0, %c0_i32, %c0_i32_0 : i32, i32, i32
  }
  func.func @transform_1(%arg0: i32) -> (i32, i32, i32) {
    %c0_i32 = arith.constant 0 : i32
    %c0_i32_0 = arith.constant 0 : i32
    %c0_i32_1 = arith.constant 0 : i32
    %c0_i32_2 = arith.constant 0 : i32
    return %c0_i32, %c0_i32_0, %c0_i32_1 : i32, i32, i32
  }
  func.func @transform_2(%arg0: i32) -> (i32, i32) {
    %c0_i32 = arith.constant 0 : i32
    %c0_i32_0 = arith.constant 0 : i32
    %c0_i32_1 = arith.constant 0 : i32
    return %c0_i32, %c0_i32_0 : i32, i32
  }
  func.func @transform_3(%arg0: i32) -> (i32, i32, i32) {
    %c0_i32 = arith.constant 0 : i32
    %c0_i32_0 = arith.constant 0 : i32
    %c0_i32_1 = arith.constant 0 : i32
    return %arg0, %c0_i32, %c0_i32_0 : i32, i32, i32
  }
}

</mosaic_0001>

<llo_original>
// kernel: tpu_custom_call.1
$region0: #{tpu_custom_call.1}
  #allocation0 [shape = 'u32[]', space=smem, size = 0x4, offset = 0x4, fixed_abs, tag = 'smem constant byte address 0x4 - core index']
  #allocation1 [shape = 'u32[144,128]{1,0:T(1,128)}', space=vmem, size = 0x12000, scoped, tag = 'internal scratch']
  #allocation2 [shape = 'bf16[160,260]{1,0:T(8,128)(2,1)}', space=vmem, size = 0x1e000, scoped, tag = 'scratch operand']
  %s0 = inlined_call_operand.hbm [shape: bf16[2,32,324], index: 0, kind: input, shape index: {}]
  %s1 = inlined_call_operand.hbm [shape: bf16[5,32,160], index: 1, kind: input, shape index: {}]
  %s2 = inlined_call_operand.hbm [shape: f32[5,256], index: 2, kind: input, shape index: {}]
  %s3 = inlined_call_operand.hbm [shape: bf16[2,32,256], index: 3, kind: output, shape index: {}]
  %s4 = sld [smem:[#allocation0]]
  $region57: #{tpu_custom_call.1} parent=0
    _
  %s6 = ssub.s32 1, %s4
  %s7 = scalar_select 0, %s6, %s4
  $region1: #{tpu_custom_call.1} parent=0
    #allocation3 [shape = 'u8[49152]{0}', space=vmem, size = 0xc000, scoped, tag = 'input window, operand 0']
    #allocation4 [shape = 's32[2]{0}', space=sflag, size = 0x8, scoped, tag = 'scoped memory for tpu_custom_call.1']
    #allocation5 [shape = 's32[2]{0}', space=sflag, size = 0x8, scoped, tag = 'scoped memory for tpu_custom_call.1']
    #allocation6 [shape = 'u8[81920]{0}', space=vmem, size = 0x14000, scoped, tag = 'input window, operand 1, single buffered']
    #allocation7 [shape = 's32[1]{0}', space=sflag, size = 0x4, scoped, tag = 'scoped memory for tpu_custom_call.1']
    #allocation8 [shape = 'u8[8192]{0}', space=vmem, size = 0x2000, scoped, tag = 'input window, operand 2, single buffered']
    #allocation9 [shape = 'u8[32768]{0}', space=vmem, size = 0x8000, scoped, tag = 'output window, operand 0']
    %8 = vsyncpa [#allocation4], 0
    %s9 = scalar_lea.sflag [#allocation4], 1
    %10 = vsyncpa %s9, 0
    %11 = vsyncpa [#allocation7], 0
    %12 = vsyncpa [#allocation5], 0
    %s13 = scalar_lea.sflag [#allocation5], 1
    %14 = vsyncpa %s13, 0
    loop: start=0, step=1, limit=4
    $region2: #{tpu_custom_call.1} parent=1 // loop_pre_header
      _
    $region3: #{tpu_custom_call.1} parent=1 // loop_header
      %s16 = sphi 0, %s20
      %p17 = scmp.ge.s32.totalorder %s16, 4
      %s26 = sphi 0, %s28
      %s29 = sphi 0, %s26
      %s30 = sphi 0, %s29
      %s46 = sphi 0, %s30
      %s50 = sphi 0, %s50
      %s52 = sphi 0, %s50
      %s53 = sphi 0, %s52
      %s67 = sphi 0, %s53
      %s71 = sphi 0, %s71
      %s73 = sphi 0, %s71
      %s74 = sphi 0, %s73
      %s88 = sphi 0, %s74
      %s94 = sphi 0, %s96
      %s97 = sphi 0, %s94
      %s98 = sphi 0, %s97
      %s114 = sphi 0, %s98
    $region4: #{tpu_custom_call.1} parent=1 // loop_header_branch
      %19 = sbr.rel (%p17) target = $region8
    $region5: #{tpu_custom_call.1} parent=1 // loop_body
      %s21 = ssub.s32 %s16, 1
      %s22 = ssub.s32 %s16, 2
      %s23 = sadd.s32 %s16, 1
      %s24 = ssub.s32 %s16, %s23
      %p25 = scmp.eq.s32.totalorder %s24, 0
      %s27 = sadd.s32 %s26, 1
      %s28 = scalar_select %p25, %s26, %s27
      %p31 = pneg %p25
      %p32 = scmp.eq.s32.totalorder %s16, 1
      %p33 = por %p31, %p32
      %p34 = scmp.ne.s32.totalorder %s26, %s29
      %p35 = scmp.eq.s32.totalorder %s16, 0
      %p36 = por %p34, %p35
      %p37 = scmp.ne.s32.totalorder %s26, %s29
      %p38 = scmp.eq.s32.totalorder %s21, 1
      %p39 = por %p37, %p38
      %p40 = scmp.ne.s32.totalorder %s29, %s30
      %p41 = scmp.eq.s32.totalorder %s21, 0
      %p42 = por %p40, %p41
      %p43 = scmp.ne.s32.totalorder %s29, %s30
      %p44 = scmp.eq.s32.totalorder %s22, 1
      %p45 = por %p43, %p44
      %p47 = scmp.ne.s32.totalorder %s30, %s46
      %p48 = scmp.eq.s32.totalorder %s22, 0
      %p49 = por %p47, %p48
      %s51 = sadd.s32 %s50, 1
      %p54 = scmp.eq.s32.totalorder %s16, 1
      %p55 = scmp.ne.s32.totalorder %s50, %s52
      %p56 = scmp.eq.s32.totalorder %s16, 0
      %p57 = por %p55, %p56
      %p58 = scmp.ne.s32.totalorder %s50, %s52
      %p59 = scmp.eq.s32.totalorder %s21, 1
      %p60 = por %p58, %p59
      %p61 = scmp.ne.s32.totalorder %s52, %s53
      %p62 = scmp.eq.s32.totalorder %s21, 0
      %p63 = por %p61, %p62
      %p64 = scmp.ne.s32.totalorder %s52, %s53
      %p65 = scmp.eq.s32.totalorder %s22, 1
      %p66 = por %p64, %p65
      %p68 = scmp.ne.s32.totalorder %s53, %s67
      %p69 = scmp.eq.s32.totalorder %s22, 0
      %p70 = por %p68, %p69
      %s72 = sadd.s32 %s71, 1
      %p75 = scmp.eq.s32.totalorder %s16, 1
      %p76 = scmp.ne.s32.totalorder %s71, %s73
      %p77 = scmp.eq.s32.totalorder %s16, 0
      %p78 = por %p76, %p77
      %p79 = scmp.ne.s32.totalorder %s71, %s73
      %p80 = scmp.eq.s32.totalorder %s21, 1
      %p81 = por %p79, %p80
      %p82 = scmp.ne.s32.totalorder %s73, %s74
      %p83 = scmp.eq.s32.totalorder %s21, 0
      %p84 = por %p82, %p83
      %p85 = scmp.ne.s32.totalorder %s73, %s74
      %p86 = scmp.eq.s32.totalorder %s22, 1
      %p87 = por %p85, %p86
      %p89 = scmp.ne.s32.totalorder %s74, %s88
      %p90 = scmp.eq.s32.totalorder %s22, 0
      %p91 = por %p89, %p90
      %s92 = ssub.s32 %s16, %s23
      %p93 = scmp.eq.s32.totalorder %s92, 0
      %s95 = sadd.s32 %s94, 1
      %s96 = scalar_select %p93, %s94, %s95
      %p99 = pneg %p93
      %p100 = scmp.eq.s32.totalorder %s16, 1
      %p101 = por %p99, %p100
      %p102 = scmp.ne.s32.totalorder %s94, %s97
      %p103 = scmp.eq.s32.totalorder %s16, 0
      %p104 = por %p102, %p103
      %p105 = scmp.ne.s32.totalorder %s94, %s97
      %p106 = scmp.eq.s32.totalorder %s21, 1
      %p107 = por %p105, %p106
      %p108 = scmp.ne.s32.totalorder %s97, %s98
      %p109 = scmp.eq.s32.totalorder %s21, 0
      %p110 = por %p108, %p109
      %p111 = scmp.ne.s32.totalorder %s97, %s98
      %p112 = scmp.eq.s32.totalorder %s22, 1
      %p113 = por %p111, %p112
      %p115 = scmp.ne.s32.totalorder %s98, %s114
      %p116 = scmp.eq.s32.totalorder %s22, 0
      %p117 = por %p115, %p116
      %p118 = scmp.le.s32.totalorder 1, %s16
      %p119 = scmp.lt.s32.totalorder %s16, 3
      %p120 = pnand %p118, %p119
      %p121 = pneg %p120
      // Predicated region
      $region9: #{tpu_custom_call.1} parent=5 // pred_check
        _
      $region10: #{tpu_custom_call.1} parent=5 // pred_check_branch
        %123 = sbr.rel (%p120) target = $region12
      $region11: #{tpu_custom_call.1} parent=5 // pred_region
        %s124 = ssub.s32 %s16, 1
        // Predicated region
        $region13: #{tpu_custom_call.1} parent=11 // pred_check
          %p125 = pneg %p63
        $region14: #{tpu_custom_call.1} parent=11 // pred_check_branch
          %127 = sbr.rel (%p125) target = $region16
        $region15: #{tpu_custom_call.1} parent=11 // pred_region
          %s129 = ssub.s32 2560, 2560
          %130 = vsyncadd [#allocation7], %s129
          %s131 = sshll.u32 [#allocation6], 4
          %s132 = int_to_ptr.vmem [resolvable:$true] %s131
          %137 = dma.hbm_to_vmem [thread:$0]  %s1, 2560, %s132, [#allocation7], 128, 128, 8
        $region16: #{tpu_custom_call.1} parent=11 // pred_fallthru
          _
        // Predicated region
        $region17: #{tpu_custom_call.1} parent=11 // pred_check
          %p138 = pneg %p84
        $region18: #{tpu_custom_call.1} parent=11 // pred_check_branch
          %140 = sbr.rel (%p138) target = $region20
        $region19: #{tpu_custom_call.1} parent=11 // pred_region
          %s142 = ssub.s32 256, 256
          %143 = vsyncadd [#allocation7], %s142
          %s145 = sshll.u32 [#allocation8], 4
          %s146 = int_to_ptr.vmem [resolvable:$true] %s145
          %148 = dma.hbm_to_vmem [thread:$0]  %s2, 256, %s146, [#allocation7]
        $region20: #{tpu_custom_call.1} parent=11 // pred_fallthru
          _
      $region12: #{tpu_custom_call.1} parent=5 // pred_fallthru
        _
      %p149 = scmp.lt.s32.totalorder %s16, 2
      // Predicated region
      $region21: #{tpu_custom_call.1} parent=5 // pred_check
        %p150 = pneg %p149
      $region22: #{tpu_custom_call.1} parent=5 // pred_check_branch
        %152 = sbr.rel (%p150) target = $region24
      $region23: #{tpu_custom_call.1} parent=5 // pred_region
        // Predicated region
        $region25: #{tpu_custom_call.1} parent=23 // pred_check
          %p153 = pneg %p36
        $region26: #{tpu_custom_call.1} parent=23 // pred_check_branch
          %155 = sbr.rel (%p153) target = $region28
        $region27: #{tpu_custom_call.1} parent=23 // pred_region
          %s156 = sand.u32 %s26, 1
          %s157 = scalar_lea.sflag [#allocation4], %s156
          %s158 = sand.u32 %s26, 1
          %s159 = smul.addr %s158, 48
          %s160 = scalar_lea.vmem [#allocation3], %s159
          %s162 = ssub.s32 768, 768
          %163 = vsyncadd %s157, %s162
          %s164 = smul.addr %s16, 12
          %s165 = smul.addr %s164, 64
          %s166 = scalar_lea.hbm %s0, %s165
          %s167 = sshll.u32 %s160, 4
          %s168 = int_to_ptr.vmem [resolvable:$true] %s167
          %173 = dma.hbm_to_vmem [thread:$0]  %s166, 768, %s168, %s157, 192, 192, 12
        $region28: #{tpu_custom_call.1} parent=23 // pred_fallthru
          _
      $region24: #{tpu_custom_call.1} parent=5 // pred_fallthru
        _
      %p174 = scmp.le.s32.totalorder 1, %s16
      %p175 = scmp.lt.s32.totalorder %s16, 3
      %p176 = pnand %p174, %p175
      %p177 = pneg %p176
      // Predicated region
      $region29: #{tpu_custom_call.1} parent=5 // pred_check
        _
      $region30: #{tpu_custom_call.1} parent=5 // pred_check_branch
        %179 = sbr.rel (%p176) target = $region32
      $region31: #{tpu_custom_call.1} parent=5 // pred_region
        %s180 = ssub.s32 %s16, 1
        %s181 = sand.u32 %s29, 1
        %s182 = scalar_lea.sflag [#allocation4], %s181
        %s183 = sand.u32 %s29, 1
        %s184 = smul.addr %s183, 48
        %s185 = scalar_lea.vmem [#allocation3], %s184
        // Predicated region
        $region33: #{tpu_custom_call.1} parent=31 // pred_check
          %p186 = pneg %p42
        $region34: #{tpu_custom_call.1} parent=31 // pred_check_branch
          %188 = sbr.rel (%p186) target = $region36
        $region35: #{tpu_custom_call.1} parent=31 // pred_region
          %189 = dma.done %s182, 768
        $region36: #{tpu_custom_call.1} parent=31 // pred_fallthru
          _
        // Predicated region
        $region37: #{tpu_custom_call.1} parent=31 // pred_check
          %p190 = pneg %p63
        $region38: #{tpu_custom_call.1} parent=31 // pred_check_branch
          %192 = sbr.rel (%p190) target = $region40
        $region39: #{tpu_custom_call.1} parent=31 // pred_region
          %193 = dma.done [#allocation7], 2560
        $region40: #{tpu_custom_call.1} parent=31 // pred_fallthru
          _
        // Predicated region
        $region41: #{tpu_custom_call.1} parent=31 // pred_check
          %p194 = pneg %p84
        $region42: #{tpu_custom_call.1} parent=31 // pred_check_branch
          %196 = sbr.rel (%p194) target = $region44
        $region43: #{tpu_custom_call.1} parent=31 // pred_region
          %197 = dma.done [#allocation7], 256
        $region44: #{tpu_custom_call.1} parent=31 // pred_fallthru
          _
        %s198 = sand.u32 %s29, 1
        %s199 = scalar_lea.sflag [#allocation4], %s198
        %s200 = sand.u32 %s29, 1
        %s201 = smul.addr %s200, 48
        %s202 = scalar_lea.vmem [#allocation3], %s201
        %p203 = pneg %p42
        %p204 = pneg %p39
        %p205 = pneg %p63
        %p206 = pneg %p60
        %p207 = pneg %p84
        %p208 = pneg %p81
        %p209 = pneg %p110
        %p210 = pneg %p107
        %s211 = sand.u32 %s97, 1
        %s212 = scalar_lea.sflag [#allocation5], %s211
        %s213 = sand.u32 %s97, 1
        %s214 = smul.addr %s213, 32
        %s215 = scalar_lea.vmem [#allocation9], %s214
        %v217 = vld [vmem:[%s185] sm:$0xff]
        %v218 = vld [vmem:[%s185 + $0x8] sm:$0xf]
        %v219 = vld [vmem:[%s185 + $0xc] sm:$0xff]
        %v220 = vld [vmem:[%s185 + $0x14] sm:$0xf]
        %v221 = vld [vmem:[%s185 + $0x18] sm:$0xff]
        %v222 = vld [vmem:[%s185 + $0x20] sm:$0xf]
        %v223 = vld [vmem:[%s185 + $0x24] sm:$0xff]
        %v224 = vld [vmem:[%s185 + $0x2c] sm:$0xf]
        %225 = vst [vmem:[#allocation2] sm:$0xff] %v217
        %vm226 = vcmask 27648
        %227 = vst.msk [vmem:[#allocation2 + $0x8] sm:$0xf] %vm226, %v218
        %228 = vst [vmem:[#allocation2 + $0xc] sm:$0xff] %v219
        %229 = vst.msk [vmem:[#allocation2 + $0x14] sm:$0xf] %vm226, %v220
        %230 = vst [vmem:[#allocation2 + $0x18] sm:$0xff] %v221
        %231 = vst.msk [vmem:[#allocation2 + $0x20] sm:$0xf] %vm226, %v222
        %232 = vst [vmem:[#allocation2 + $0x24] sm:$0xff] %v223
        %233 = vst.msk [vmem:[#allocation2 + $0x2c] sm:$0xf] %vm226, %v224
        %v234 = vld [vmem:[%s185] sm:$0xff]
        %v235 = vld [vmem:[%s185 + $0x8] sm:$0xf]
        %v236 = vld [vmem:[%s185 + $0xc] sm:$0xff]
        %v237 = vld [vmem:[%s185 + $0x14] sm:$0xf]
        %v238 = vld [vmem:[%s185 + $0x18] sm:$0xff]
        %v239 = vld [vmem:[%s185 + $0x20] sm:$0xf]
        %v240 = vld [vmem:[%s185 + $0x24] sm:$0xff]
        %v241 = vld [vmem:[%s185 + $0x2c] sm:$0xf]
        %250 = vrot.lane.b32.xlu0 %v234, 112
        %v251 = vpop.permute.xlu0 %250
        %252 = vrot.lane.b32.xlu0 %v235, 112
        %v253 = vpop.permute.xlu0 %252
        %254 = vrot.lane.b32.xlu0 %v236, 112
        %v255 = vpop.permute.xlu0 %254
        %256 = vrot.lane.b32.xlu0 %v237, 112
        %v257 = vpop.permute.xlu0 %256
        %258 = vrot.lane.b32.xlu0 %v238, 112
        %v259 = vpop.permute.xlu0 %258
        %260 = vrot.lane.b32.xlu0 %v239, 112
        %v261 = vpop.permute.xlu0 %260
        %262 = vrot.lane.b32.xlu0 %v240, 112
        %v263 = vpop.permute.xlu0 %262
        %264 = vrot.lane.b32.xlu0 %v241, 112
        %v265 = vpop.permute.xlu0 %264
        %v266 = vrot.slane %v251, 4
        %v267 = vrot.slane %v253, 4
        %v268 = vrot.slane %v255, 4
        %v269 = vrot.slane %v257, 4
        %v270 = vrot.slane %v259, 4
        %v271 = vrot.slane %v261, 4
        %v272 = vrot.slane %v263, 4
        %v273 = vrot.slane %v265, 4
        %vm274 = vcmask 1043456
        %v275 = vsel %vm274, %v266, %v267
        %vm276 = vcmask 916480
        %v277 = vsel %vm276, %v251, %v275
        %v278 = vsel %vm274, %v268, %v269
        %v279 = vsel %vm276, %v255, %v278
        %v280 = vsel %vm274, %v270, %v271
        %v281 = vsel %vm276, %v259, %v280
        %v282 = vsel %vm274, %v272, %v273
        %v283 = vsel %vm276, %v263, %v282
        %292 = vst [vmem:[#allocation2 + $0x30] sm:$0xff] %v277
        %293 = vst.msk [vmem:[#allocation2 + $0x38] sm:$0xf] %vm226, %v253
        %294 = vst [vmem:[#allocation2 + $0x3c] sm:$0xff] %v279
        %295 = vst.msk [vmem:[#allocation2 + $0x44] sm:$0xf] %vm226, %v257
        %296 = vst [vmem:[#allocation2 + $0x48] sm:$0xff] %v281
        %297 = vst.msk [vmem:[#allocation2 + $0x50] sm:$0xf] %vm226, %v261
        %298 = vst [vmem:[#allocation2 + $0x54] sm:$0xff] %v283
        %299 = vst.msk [vmem:[#allocation2 + $0x5c] sm:$0xf] %vm226, %v265
        %v300 = vld [vmem:[%s185] sm:$0xff]
        %v301 = vld [vmem:[%s185 + $0x8] sm:$0xf]
        %v302 = vld [vmem:[%s185 + $0xc] sm:$0xff]
        %v303 = vld [vmem:[%s185 + $0x14] sm:$0xf]
        %v304 = vld [vmem:[%s185 + $0x18] sm:$0xff]
        %v305 = vld [vmem:[%s185 + $0x20] sm:$0xf]
        %v306 = vld [vmem:[%s185 + $0x24] sm:$0xff]
        %v307 = vld [vmem:[%s185 + $0x2c] sm:$0xf]
        %316 = vrot.lane.b32.xlu0 %v300, 96
        %v317 = vpop.permute.xlu0 %316
        %318 = vrot.lane.b32.xlu0 %v301, 96
        %v319 = vpop.permute.xlu0 %318
        %320 = vrot.lane.b32.xlu0 %v302, 96
        %v321 = vpop.permute.xlu0 %320
        %322 = vrot.lane.b32.xlu0 %v303, 96
        %v323 = vpop.permute.xlu0 %322
        %324 = vrot.lane.b32.xlu0 %v304, 96
        %v325 = vpop.permute.xlu0 %324
        %326 = vrot.lane.b32.xlu0 %v305, 96
        %v327 = vpop.permute.xlu0 %326
        %328 = vrot.lane.b32.xlu0 %v306, 96
        %v329 = vpop.permute.xlu0 %328
        %330 = vrot.lane.b32.xlu0 %v307, 96
        %v331 = vpop.permute.xlu0 %330
        %v332 = vrot.slane %v317, 4
        %v333 = vrot.slane %v319, 4
        %v334 = vrot.slane %v321, 4
        %v335 = vrot.slane %v323, 4
        %v336 = vrot.slane %v325, 4
        %v337 = vrot.slane %v327, 4
        %v338 = vrot.slane %v329, 4
        %v339 = vrot.slane %v331, 4
        %v340 = vsel %vm274, %v332, %v333
        %vm341 = vcmask 785408
        %v342 = vsel %vm341, %v317, %v340
        %v343 = vsel %vm274, %v334, %v335
        %v344 = vsel %vm341, %v321, %v343
        %v345 = vsel %vm274, %v336, %v337
        %v346 = vsel %vm341, %v325, %v345
        %v347 = vsel %vm274, %v338, %v339
        %v348 = vsel %vm341, %v329, %v347
        %357 = vst [vmem:[#allocation2 + $0x60] sm:$0xff] %v342
        %358 = vst.msk [vmem:[#allocation2 + $0x68] sm:$0xf] %vm226, %v319
        %359 = vst [vmem:[#allocation2 + $0x6c] sm:$0xff] %v344
        %360 = vst.msk [vmem:[#allocation2 + $0x74] sm:$0xf] %vm226, %v323
        %361 = vst [vmem:[#allocation2 + $0x78] sm:$0xff] %v346
        %362 = vst.msk [vmem:[#allocation2 + $0x80] sm:$0xf] %vm226, %v327
        %363 = vst [vmem:[#allocation2 + $0x84] sm:$0xff] %v348
        %364 = vst.msk [vmem:[#allocation2 + $0x8c] sm:$0xf] %vm226, %v331
        %v365 = vld [vmem:[%s185] sm:$0xff]
        %v366 = vld [vmem:[%s185 + $0x8] sm:$0xf]
        %v367 = vld [vmem:[%s185 + $0xc] sm:$0xff]
        %v368 = vld [vmem:[%s185 + $0x14] sm:$0xf]
        %v369 = vld [vmem:[%s185 + $0x18] sm:$0xff]
        %v370 = vld [vmem:[%s185 + $0x20] sm:$0xf]
        %v371 = vld [vmem:[%s185 + $0x24] sm:$0xff]
        %v372 = vld [vmem:[%s185 + $0x2c] sm:$0xf]
        %381 = vrot.lane.b32.xlu0 %v365, 80
        %v382 = vpop.permute.xlu0 %381
        %383 = vrot.lane.b32.xlu0 %v366, 80
        %v384 = vpop.permute.xlu0 %383
        %385 = vrot.lane.b32.xlu0 %v367, 80
        %v386 = vpop.permute.xlu0 %385
        %387 = vrot.lane.b32.xlu0 %v368, 80
        %v388 = vpop.permute.xlu0 %387
        %389 = vrot.lane.b32.xlu0 %v369, 80
        %v390 = vpop.permute.xlu0 %389
        %391 = vrot.lane.b32.xlu0 %v370, 80
        %v392 = vpop.permute.xlu0 %391
        %393 = vrot.lane.b32.xlu0 %v371, 80
        %v394 = vpop.permute.xlu0 %393
        %395 = vrot.lane.b32.xlu0 %v372, 80
        %v396 = vpop.permute.xlu0 %395
        %v397 = vrot.slane %v382, 4
        %v398 = vrot.slane %v384, 4
        %v399 = vrot.slane %v386, 4
        %v400 = vrot.slane %v388, 4
        %v401 = vrot.slane %v390, 4
        %v402 = vrot.slane %v392, 4
        %v403 = vrot.slane %v394, 4
        %v404 = vrot.slane %v396, 4
        %v405 = vsel %vm274, %v397, %v398
        %vm406 = vcmask 654336
        %v407 = vsel %vm406, %v382, %v405
        %v408 = vsel %vm274, %v399, %v400
        %v409 = vsel %vm406, %v386, %v408
        %v410 = vsel %vm274, %v401, %v402
        %v411 = vsel %vm406, %v390, %v410
        %v412 = vsel %vm274, %v403, %v404
        %v413 = vsel %vm406, %v394, %v412
        %422 = vst [vmem:[#allocation2 + $0x90] sm:$0xff] %v407
        %423 = vst.msk [vmem:[#allocation2 + $0x98] sm:$0xf] %vm226, %v384
        %424 = vst [vmem:[#allocation2 + $0x9c] sm:$0xff] %v409
        %425 = vst.msk [vmem:[#allocation2 + $0xa4] sm:$0xf] %vm226, %v388
        %426 = vst [vmem:[#allocation2 + $0xa8] sm:$0xff] %v411
        %427 = vst.msk [vmem:[#allocation2 + $0xb0] sm:$0xf] %vm226, %v392
        %428 = vst [vmem:[#allocation2 + $0xb4] sm:$0xff] %v413
        %429 = vst.msk [vmem:[#allocation2 + $0xbc] sm:$0xf] %vm226, %v396
        %v430 = vld [vmem:[%s185] sm:$0xff]
        %v431 = vld [vmem:[%s185 + $0x8] sm:$0xf]
        %v432 = vld [vmem:[%s185 + $0xc] sm:$0xff]
        %v433 = vld [vmem:[%s185 + $0x14] sm:$0xf]
        %v434 = vld [vmem:[%s185 + $0x18] sm:$0xff]
        %v435 = vld [vmem:[%s185 + $0x20] sm:$0xf]
        %v436 = vld [vmem:[%s185 + $0x24] sm:$0xff]
        %v437 = vld [vmem:[%s185 + $0x2c] sm:$0xf]
        %446 = vrot.lane.b32.xlu0 %v430, 64
        %v447 = vpop.permute.xlu0 %446
        %448 = vrot.lane.b32.xlu0 %v431, 64
        %v449 = vpop.permute.xlu0 %448
        %450 = vrot.lane.b32.xlu0 %v432, 64
        %v451 = vpop.permute.xlu0 %450
        %452 = vrot.lane.b32.xlu0 %v433, 64
        %v453 = vpop.permute.xlu0 %452
        %454 = vrot.lane.b32.xlu0 %v434, 64
        %v455 = vpop.permute.xlu0 %454
        %456 = vrot.lane.b32.xlu0 %v435, 64
        %v457 = vpop.permute.xlu0 %456
        %458 = vrot.lane.b32.xlu0 %v436, 64
        %v459 = vpop.permute.xlu0 %458
        %460 = vrot.lane.b32.xlu0 %v437, 64
        %v461 = vpop.permute.xlu0 %460
        %v462 = vrot.slane %v447, 4
        %v463 = vrot.slane %v449, 4
        %v464 = vrot.slane %v451, 4
        %v465 = vrot.slane %v453, 4
        %v466 = vrot.slane %v455, 4
        %v467 = vrot.slane %v457, 4
        %v468 = vrot.slane %v459, 4
        %v469 = vrot.slane %v461, 4
        %v470 = vsel %vm274, %v462, %v463
        %vm471 = vcmask 523264
        %v472 = vsel %vm471, %v447, %v470
        %v473 = vsel %vm274, %v464, %v465
        %v474 = vsel %vm471, %v451, %v473
        %v475 = vsel %vm274, %v466, %v467
        %v476 = vsel %vm471, %v455, %v475
        %v477 = vsel %vm274, %v468, %v469
        %v478 = vsel %vm471, %v459, %v477
        %487 = vst [vmem:[#allocation2 + $0xc0] sm:$0xff] %v472
        %488 = vst.msk [vmem:[#allocation2 + $0xc8] sm:$0xf] %vm226, %v449
        %489 = vst [vmem:[#allocation2 + $0xcc] sm:$0xff] %v474
        %490 = vst.msk [vmem:[#allocation2 + $0xd4] sm:$0xf] %vm226, %v453
        %491 = vst [vmem:[#allocation2 + $0xd8] sm:$0xff] %v476
        %492 = vst.msk [vmem:[#allocation2 + $0xe0] sm:$0xf] %vm226, %v457
        %493 = vst [vmem:[#allocation2 + $0xe4] sm:$0xff] %v478
        %494 = vst.msk [vmem:[#allocation2 + $0xec] sm:$0xf] %vm226, %v461
        %v495 = vld [vmem:[#allocation6] sm:$0xff]
        %v496 = vld [vmem:[#allocation6 + $0x8] sm:$0xff]
        %v497 = vld [vmem:[#allocation6 + $0x10] sm:$0xff]
        %v498 = vld [vmem:[#allocation6 + $0x18] sm:$0xff]
        %v499 = vld [vmem:[#allocation2] sm:$0xff]
        %v500 = vld [vmem:[#allocation2 + $0xc] sm:$0xff]
        %v501 = vld [vmem:[#allocation2 + $0x18] sm:$0xff]
        %v502 = vld [vmem:[#allocation2 + $0x24] sm:$0xff]
        %v503 = vld [vmem:[#allocation2 + $0x30] sm:$0xff]
        %v504 = vld [vmem:[#allocation2 + $0x3c] sm:$0xff]
        %v505 = vld [vmem:[#allocation2 + $0x48] sm:$0xff]
        %v506 = vld [vmem:[#allocation2 + $0x54] sm:$0xff]
        %v507 = vld [vmem:[#allocation2 + $0x60] sm:$0xff]
        %v508 = vld [vmem:[#allocation2 + $0x6c] sm:$0xff]
        %v509 = vld [vmem:[#allocation2 + $0x78] sm:$0xff]
        %v510 = vld [vmem:[#allocation2 + $0x84] sm:$0xff]
        %v511 = vld [vmem:[#allocation2 + $0x90] sm:$0xff]
        %v512 = vld [vmem:[#allocation2 + $0x9c] sm:$0xff]
        %v513 = vld [vmem:[#allocation2 + $0xa8] sm:$0xff]
        %v514 = vld [vmem:[#allocation2 + $0xb4] sm:$0xff]
        %v515 = vld [vmem:[#allocation2 + $0xc0] sm:$0xff]
        %v516 = vld [vmem:[#allocation2 + $0xcc] sm:$0xff]
        %v517 = vld [vmem:[#allocation2 + $0xd8] sm:$0xff]
        %v518 = vld [vmem:[#allocation2 + $0xe4] sm:$0xff]
        %v523 = vunpack.c.l.b16 %v495
        %v524 = vunpack.c.h.b16 %v495
        %v525 = vunpack.c.l.b16 %v496
        %v526 = vunpack.c.h.b16 %v496
        %v527 = vunpack.c.l.b16 %v497
        %v528 = vunpack.c.h.b16 %v497
        %v529 = vunpack.c.l.b16 %v498
        %v530 = vunpack.c.h.b16 %v498
        %v531 = vpack.c.b16 %v525, %v523
        %v532 = vpack.c.b16 %v526, %v524
        %v533 = vpack.c.b16 %v529, %v527
        %v534 = vpack.c.b16 %v530, %v528
        %v557 = vunpack.c.l.b16 %v499
        %v558 = vunpack.c.h.b16 %v499
        %v559 = vunpack.c.l.b16 %v500
        %v560 = vunpack.c.h.b16 %v500
        %v561 = vunpack.c.l.b16 %v501
        %v562 = vunpack.c.h.b16 %v501
        %v563 = vunpack.c.l.b16 %v502
        %v564 = vunpack.c.h.b16 %v502
        %v565 = vunpack.c.l.b16 %v503
        %v566 = vunpack.c.h.b16 %v503
        %v567 = vunpack.c.l.b16 %v504
        %v568 = vunpack.c.h.b16 %v504
        %v569 = vunpack.c.l.b16 %v505
        %v570 = vunpack.c.h.b16 %v505
        %v571 = vunpack.c.l.b16 %v506
        %v572 = vunpack.c.h.b16 %v506
        %v573 = vunpack.c.l.b16 %v507
        %v574 = vunpack.c.h.b16 %v507
        %v575 = vunpack.c.l.b16 %v508
        %v576 = vunpack.c.h.b16 %v508
        %v577 = vunpack.c.l.b16 %v509
        %v578 = vunpack.c.h.b16 %v509
        %v579 = vunpack.c.l.b16 %v510
        %v580 = vunpack.c.h.b16 %v510
        %v581 = vunpack.c.l.b16 %v511
        %v582 = vunpack.c.h.b16 %v511
        %v583 = vunpack.c.l.b16 %v512
        %v584 = vunpack.c.h.b16 %v512
        %v585 = vunpack.c.l.b16 %v513
        %v586 = vunpack.c.h.b16 %v513
        %v587 = vunpack.c.l.b16 %v514
        %v588 = vunpack.c.h.b16 %v514
        %v589 = vunpack.c.l.b16 %v515
        %v590 = vunpack.c.h.b16 %v515
        %v591 = vunpack.c.l.b16 %v516
        %v592 = vunpack.c.h.b16 %v516
        %v593 = vunpack.c.l.b16 %v517
        %v594 = vunpack.c.h.b16 %v517
        %v595 = vunpack.c.l.b16 %v518
        %v596 = vunpack.c.h.b16 %v518
        %v597 = vpack.c.b16 %v559, %v557
        %v598 = vpack.c.b16 %v560, %v558
        %v599 = vpack.c.b16 %v563, %v561
        %v600 = vpack.c.b16 %v564, %v562
        %v601 = vpack.c.b16 %v567, %v565
        %v602 = vpack.c.b16 %v568, %v566
        %v603 = vpack.c.b16 %v571, %v569
        %v604 = vpack.c.b16 %v572, %v570
        %v605 = vpack.c.b16 %v575, %v573
        %v606 = vpack.c.b16 %v576, %v574
        %v607 = vpack.c.b16 %v579, %v577
        %v608 = vpack.c.b16 %v580, %v578
        %v609 = vpack.c.b16 %v583, %v581
        %v610 = vpack.c.b16 %v584, %v582
        %v611 = vpack.c.b16 %v587, %v585
        %v612 = vpack.c.b16 %v588, %v586
        %v613 = vpack.c.b16 %v591, %v589
        %v614 = vpack.c.b16 %v592, %v590
        %v615 = vpack.c.b16 %v595, %v593
        %v616 = vpack.c.b16 %v596, %v594
        %vm637 = vcmask 261120
        %v639 = vsel %vm637, %v532, 0
        %v642 = vsel %vm637, %v534, 0
        %644 = vmatprep.subr.bf16.mxu0 %v612
        %645 = vmatpush1.bf16.msra.mxu0 %v611
        %646 = vmatprep.subr.bf16.mxu0 %v610
        %647 = vmatpush1.bf16.msra.mxu0 %v609
        %648 = vmatprep.subr.bf16.mxu0 %v608
        %649 = vmatpush1.bf16.msra.mxu0 %v607
        %650 = vmatprep.subr.bf16.mxu0 %v606
        %651 = vmatpush1.bf16.msra.mxu0 %v605
        %652 = vmatprep.subr.bf16.mxu0 %v604
        %653 = vmatpush1.bf16.msra.mxu0 %v603
        %654 = vmatprep.subr.bf16.mxu0 %v602
        %655 = vmatpush1.bf16.msra.mxu0 %v601
        %656 = vmatprep.subr.bf16.mxu0 %v600
        %657 = vmatpush1.bf16.msra.mxu0 %v599
        %658 = vmatprep.subr.bf16.mxu0 %v598
        %659 = vmatpush1.bf16.msra.mxu0 %v597
        %660 = vmatprep.subr.bf16.mxu0 0
        %661 = vmatpush2.bf16.msra.mxu0 0
        %662 = vmatprep.subr.bf16.mxu0 0
        %663 = vmatpush2.bf16.msra.mxu0 0
        %664 = vmatprep.subr.bf16.mxu0 0
        %665 = vmatpush2.bf16.msra.mxu0 0
        %666 = vmatprep.subr.bf16.mxu0 0
        %667 = vmatpush2.bf16.msra.mxu0 0
        %668 = vmatprep.subr.bf16.mxu0 0
        %669 = vmatpush2.bf16.msra.mxu0 0
        %670 = vmatprep.subr.bf16.mxu0 0
        %671 = vmatpush2.bf16.msra.mxu0 0
        %672 = vmatprep.subr.bf16.mxu0 %v616
        %673 = vmatpush2.bf16.msra.mxu0 %v615
        %674 = vmatprep.subr.bf16.mxu0 %v614
        %675 = vmatpush2.bf16.msra.mxu0 %v613
        %676 = vmatprep.mubr.bf16.mxu0 %v639
        %677 = vmatmul.mubr.bf16.gmra.mxu0 %v531
        %v678 = vpop.f32.mrf.mxu0
        %v679 = vadd.f32 0.0, %v678
        %v680 = vpop.f32.mrf.mxu0
        %v681 = vadd.f32 0.0, %v680
        %v682 = vpop.f32.mrf.mxu0
        %v683 = vadd.f32 0.0, %v682
        %v684 = vpop.f32.mrf.mxu0
        %v685 = vadd.f32 0.0, %v684
        %686 = vmatprep.mubr.bf16.mxu0 %v642
        %687 = vmatmul.mubr.bf16.gmra.mxu0 %v533
        %v688 = vpop.f32.mrf.mxu0
        %v689 = vadd.f32 0.0, %v688
        %v690 = vpop.f32.mrf.mxu0
        %v691 = vadd.f32 0.0, %v690
        %v692 = vpop.f32.mrf.mxu0
        %v693 = vadd.f32 0.0, %v692
        %v694 = vpop.f32.mrf.mxu0
        %v695 = vadd.f32 0.0, %v694
        %696 = vdwg.mxu0
        %v697 = vld [vmem:[#allocation8] ss:$8 sm:$0x3]
        %v699 = vlaneseq
        %v700 = vshrl.u32 %v699, 7
        %v701 = vsub.s32 0, %v700
        %v702 = vrot.slane %v697, %v701
        %v703 = vlaneseq
        %v704 = vshrl.u32 %v703, 7
        %v705 = vsub.s32 1, %v704
        %v706 = vrot.slane %v697, %v705
        %v709 = vmul.f32 %v679, %v702
        %v710 = vmul.f32 %v681, %v706
        %v711 = vmul.f32 %v683, %v702
        %v712 = vmul.f32 %v685, %v706
        %v713 = vmul.f32 %v689, %v702
        %v714 = vmul.f32 %v691, %v706
        %v715 = vmul.f32 %v693, %v702
        %v716 = vmul.f32 %v695, %v706
        %v717 = vadd.f32 %v709, 0.0
        %v718 = vadd.f32 %v710, 0.0
        %v719 = vadd.f32 %v711, 0.0
        %v720 = vadd.f32 %v712, 0.0
        %v721 = vadd.f32 %v713, 0.0
        %v722 = vadd.f32 %v714, 0.0
        %v723 = vadd.f32 %v715, 0.0
        %v724 = vadd.f32 %v716, 0.0
        %s725 = scalar_lea.vmem [#allocation6], 32
        %v726 = vld [vmem:[%s725] sm:$0xff]
        %v727 = vld [vmem:[%s725 + $0x8] sm:$0xff]
        %v728 = vld [vmem:[%s725 + $0x10] sm:$0xff]
        %v729 = vld [vmem:[%s725 + $0x18] sm:$0xff]
        %v730 = vld [vmem:[#allocation2] sm:$0xff]
        %v731 = vld [vmem:[#allocation2 + $0x8] sm:$0xf]
        %v732 = vld [vmem:[#allocation2 + $0xc] sm:$0xff]
        %v733 = vld [vmem:[#allocation2 + $0x14] sm:$0xf]
        %v734 = vld [vmem:[#allocation2 + $0x18] sm:$0xff]
        %v735 = vld [vmem:[#allocation2 + $0x20] sm:$0xf]
        %v736 = vld [vmem:[#allocation2 + $0x24] sm:$0xff]
        %v737 = vld [vmem:[#allocation2 + $0x2c] sm:$0xf]
        %v738 = vld [vmem:[#allocation2 + $0x30] sm:$0xff]
        %v739 = vld [vmem:[#allocation2 + $0x38] sm:$0xf]
        %v740 = vld [vmem:[#allocation2 + $0x3c] sm:$0xff]
        %v741 = vld [vmem:[#allocation2 + $0x44] sm:$0xf]
        %v742 = vld [vmem:[#allocation2 + $0x48] sm:$0xff]
        %v743 = vld [vmem:[#allocation2 + $0x50] sm:$0xf]
        %v744 = vld [vmem:[#allocation2 + $0x54] sm:$0xff]
        %v745 = vld [vmem:[#allocation2 + $0x5c] sm:$0xf]
        %v746 = vld [vmem:[#allocation2 + $0x60] sm:$0xff]
        %v747 = vld [vmem:[#allocation2 + $0x68] sm:$0xf]
        %v748 = vld [vmem:[#allocation2 + $0x6c] sm:$0xff]
        %v749 = vld [vmem:[#allocation2 + $0x74] sm:$0xf]
        %v750 = vld [vmem:[#allocation2 + $0x78] sm:$0xff]
        %v751 = vld [vmem:[#allocation2 + $0x80] sm:$0xf]
        %v752 = vld [vmem:[#allocation2 + $0x84] sm:$0xff]
        %v753 = vld [vmem:[#allocation2 + $0x8c] sm:$0xf]
        %v754 = vld [vmem:[#allocation2 + $0x90] sm:$0xff]
        %v755 = vld [vmem:[#allocation2 + $0x98] sm:$0xf]
        %v756 = vld [vmem:[#allocation2 + $0x9c] sm:$0xff]
        %v757 = vld [vmem:[#allocation2 + $0xa4] sm:$0xf]
        %v758 = vld [vmem:[#allocation2 + $0xa8] sm:$0xff]
        %v759 = vld [vmem:[#allocation2 + $0xb0] sm:$0xf]
        %v760 = vld [vmem:[#allocation2 + $0xb4] sm:$0xff]
        %v761 = vld [vmem:[#allocation2 + $0xbc] sm:$0xf]
        %v762 = vld [vmem:[#allocation2 + $0xc0] sm:$0xff]
        %v763 = vld [vmem:[#allocation2 + $0xc8] sm:$0xf]
        %v764 = vld [vmem:[#allocation2 + $0xcc] sm:$0xff]
        %v765 = vld [vmem:[#allocation2 + $0xd4] sm:$0xf]
        %v766 = vld [vmem:[#allocation2 + $0xd8] sm:$0xff]
        %v767 = vld [vmem:[#allocation2 + $0xe0] sm:$0xf]
        %v768 = vld [vmem:[#allocation2 + $0xe4] sm:$0xff]
        %v769 = vld [vmem:[#allocation2 + $0xec] sm:$0xf]
        %v774 = vunpack.c.l.b16 %v726
        %v775 = vunpack.c.h.b16 %v726
        %v776 = vunpack.c.l.b16 %v727
        %v777 = vunpack.c.h.b16 %v727
        %v778 = vunpack.c.l.b16 %v728
        %v779 = vunpack.c.h.b16 %v728
        %v780 = vunpack.c.l.b16 %v729
        %v781 = vunpack.c.h.b16 %v729
        %v782 = vpack.c.b16 %v776, %v774
        %v783 = vpack.c.b16 %v777, %v775
        %v784 = vpack.c.b16 %v780, %v778
        %v785 = vpack.c.b16 %v781, %v779
        %v828 = vunpack.c.l.b16 %v730
        %v829 = vunpack.c.h.b16 %v730
        %v830 = vunpack.c.l.b16 %v731
        %v831 = vunpack.c.l.b16 %v732
        %v832 = vunpack.c.h.b16 %v732
        %v833 = vunpack.c.l.b16 %v733
        %v834 = vunpack.c.l.b16 %v734
        %v835 = vunpack.c.h.b16 %v734
        %v836 = vunpack.c.l.b16 %v735
        %v837 = vunpack.c.l.b16 %v736
        %v838 = vunpack.c.h.b16 %v736
        %v839 = vunpack.c.l.b16 %v737
        %v840 = vunpack.c.l.b16 %v738
        %v841 = vunpack.c.h.b16 %v738
        %v842 = vunpack.c.l.b16 %v739
        %v843 = vunpack.c.l.b16 %v740
        %v844 = vunpack.c.h.b16 %v740
        %v845 = vunpack.c.l.b16 %v741
        %v846 = vunpack.c.l.b16 %v742
        %v847 = vunpack.c.h.b16 %v742
        %v848 = vunpack.c.l.b16 %v743
        %v849 = vunpack.c.l.b16 %v744
        %v850 = vunpack.c.h.b16 %v744
        %v851 = vunpack.c.l.b16 %v745
        %v852 = vunpack.c.l.b16 %v746
        %v853 = vunpack.c.h.b16 %v746
        %v854 = vunpack.c.l.b16 %v747
        %v855 = vunpack.c.l.b16 %v748
        %v856 = vunpack.c.h.b16 %v748
        %v857 = vunpack.c.l.b16 %v749
        %v858 = vunpack.c.l.b16 %v750
        %v859 = vunpack.c.h.b16 %v750
        %v860 = vunpack.c.l.b16 %v751
        %v861 = vunpack.c.l.b16 %v752
        %v862 = vunpack.c.h.b16 %v752
        %v863 = vunpack.c.l.b16 %v753
        %v864 = vunpack.c.l.b16 %v754
        %v865 = vunpack.c.h.b16 %v754
        %v866 = vunpack.c.l.b16 %v755
        %v867 = vunpack.c.l.b16 %v756
        %v868 = vunpack.c.h.b16 %v756
        %v869 = vunpack.c.l.b16 %v757
        %v870 = vunpack.c.l.b16 %v758
        %v871 = vunpack.c.h.b16 %v758
        %v872 = vunpack.c.l.b16 %v759
        %v873 = vunpack.c.l.b16 %v760
        %v874 = vunpack.c.h.b16 %v760
        %v875 = vunpack.c.l.b16 %v761
        %v876 = vunpack.c.l.b16 %v762
        %v877 = vunpack.c.h.b16 %v762
        %v878 = vunpack.c.l.b16 %v763
        %v879 = vunpack.c.l.b16 %v764
        %v880 = vunpack.c.h.b16 %v764
        %v881 = vunpack.c.l.b16 %v765
        %v882 = vunpack.c.l.b16 %v766
        %v883 = vunpack.c.h.b16 %v766
        %v884 = vunpack.c.l.b16 %v767
        %v885 = vunpack.c.l.b16 %v768
        %v886 = vunpack.c.h.b16 %v768
        %v887 = vunpack.c.l.b16 %v769
        %v888 = vpack.c.b16 %v831, %v828
        %v889 = vpack.c.b16 %v832, %v829
        %v890 = vpack.c.b16 %v833, %v830
        %v891 = vpack.c.b16 %v837, %v834
        %v892 = vpack.c.b16 %v838, %v835
        %v893 = vpack.c.b16 %v839, %v836
        %v894 = vpack.c.b16 %v843, %v840
        %v895 = vpack.c.b16 %v844, %v841
        %v896 = vpack.c.b16 %v845, %v842
        %v897 = vpack.c.b16 %v849, %v846
        %v898 = vpack.c.b16 %v850, %v847
        %v899 = vpack.c.b16 %v851, %v848
        %v900 = vpack.c.b16 %v855, %v852
        %v901 = vpack.c.b16 %v856, %v853
        %v902 = vpack.c.b16 %v857, %v854
        %v903 = vpack.c.b16 %v861, %v858
        %v904 = vpack.c.b16 %v862, %v859
        %v905 = vpack.c.b16 %v863, %v860
        %v906 = vpack.c.b16 %v867, %v864
        %v907 = vpack.c.b16 %v868, %v865
        %v908 = vpack.c.b16 %v869, %v866
        %v909 = vpack.c.b16 %v873, %v870
        %v910 = vpack.c.b16 %v874, %v871
        %v911 = vpack.c.b16 %v875, %v872
        %v912 = vpack.c.b16 %v879, %v876
        %v913 = vpack.c.b16 %v880, %v877
        %v914 = vpack.c.b16 %v881, %v878
        %v915 = vpack.c.b16 %v885, %v882
        %v916 = vpack.c.b16 %v886, %v883
        %v917 = vpack.c.b16 %v887, %v884
        %918 = vrot.lane.b32.xlu0 %v888, 127
        %v919 = vpop.permute.xlu0 %918
        %920 = vrot.lane.b32.xlu0 %v889, 127
        %v921 = vpop.permute.xlu0 %920
        %922 = vrot.lane.b32.xlu0 %v890, 127
        %v923 = vpop.permute.xlu0 %922
        %924 = vrot.lane.b32.xlu0 %v891, 127
        %v925 = vpop.permute.xlu0 %924
        %926 = vrot.lane.b32.xlu0 %v892, 127
        %v927 = vpop.permute.xlu0 %926
        %928 = vrot.lane.b32.xlu0 %v893, 127
        %v929 = vpop.permute.xlu0 %928
        %930 = vrot.lane.b32.xlu0 %v894, 127
        %v931 = vpop.permute.xlu0 %930
        %932 = vrot.lane.b32.xlu0 %v895, 127
        %v933 = vpop.permute.xlu0 %932
        %934 = vrot.lane.b32.xlu0 %v896, 127
        %v935 = vpop.permute.xlu0 %934
        %936 = vrot.lane.b32.xlu0 %v897, 127
        %v937 = vpop.permute.xlu0 %936
        %938 = vrot.lane.b32.xlu0 %v898, 127
        %v939 = vpop.permute.xlu0 %938
        %940 = vrot.lane.b32.xlu0 %v899, 127
        %v941 = vpop.permute.xlu0 %940
        %942 = vrot.lane.b32.xlu0 %v900, 127
        %v943 = vpop.permute.xlu0 %942
        %944 = vrot.lane.b32.xlu0 %v901, 127
        %v945 = vpop.permute.xlu0 %944
        %946 = vrot.lane.b32.xlu0 %v902, 127
        %v947 = vpop.permute.xlu0 %946
        %948 = vrot.lane.b32.xlu0 %v903, 127
        %v949 = vpop.permute.xlu0 %948
        %950 = vrot.lane.b32.xlu0 %v904, 127
        %v951 = vpop.permute.xlu0 %950
        %952 = vrot.lane.b32.xlu0 %v905, 127
        %v953 = vpop.permute.xlu0 %952
        %954 = vrot.lane.b32.xlu0 %v906, 127
        %v955 = vpop.permute.xlu0 %954
        %956 = vrot.lane.b32.xlu0 %v907, 127
        %v957 = vpop.permute.xlu0 %956
        %958 = vrot.lane.b32.xlu0 %v908, 127
        %v959 = vpop.permute.xlu0 %958
        %960 = vrot.lane.b32.xlu0 %v909, 127
        %v961 = vpop.permute.xlu0 %960
        %962 = vrot.lane.b32.xlu0 %v910, 127
        %v963 = vpop.permute.xlu0 %962
        %964 = vrot.lane.b32.xlu0 %v911, 127
        %v965 = vpop.permute.xlu0 %964
        %966 = vrot.lane.b32.xlu0 %v912, 127
        %v967 = vpop.permute.xlu0 %966
        %968 = vrot.lane.b32.xlu0 %v913, 127
        %v969 = vpop.permute.xlu0 %968
        %970 = vrot.lane.b32.xlu0 %v914, 127
        %v971 = vpop.permute.xlu0 %970
        %972 = vrot.lane.b32.xlu0 %v915, 127
        %v973 = vpop.permute.xlu0 %972
        %974 = vrot.lane.b32.xlu0 %v916, 127
        %v975 = vpop.permute.xlu0 %974
        %976 = vrot.lane.b32.xlu0 %v917, 127
        %v977 = vpop.permute.xlu0 %976
        %vm978 = vcmask 1039360
        %v979 = vsel %vm978, %v919, %v921
        %v980 = vsel %vm978, %v921, %v923
        %v981 = vsel %vm978, %v925, %v927
        %v982 = vsel %vm978, %v927, %v929
        %v983 = vsel %vm978, %v931, %v933
        %v984 = vsel %vm978, %v933, %v935
        %v985 = vsel %vm978, %v937, %v939
        %v986 = vsel %vm978, %v939, %v941
        %v987 = vsel %vm978, %v943, %v945
        %v988 = vsel %vm978, %v945, %v947
        %v989 = vsel %vm978, %v949, %v951
        %v990 = vsel %vm978, %v951, %v953
        %v991 = vsel %vm978, %v955, %v957
        %v992 = vsel %vm978, %v957, %v959
        %v993 = vsel %vm978, %v961, %v963
        %v994 = vsel %vm978, %v963, %v965
        %v995 = vsel %vm978, %v967, %v969
        %v996 = vsel %vm978, %v969, %v971
        %v997 = vsel %vm978, %v973, %v975
        %v998 = vsel %vm978, %v975, %v977
        %v1020 = vsel %vm637, %v783, 0
        %v1023 = vsel %vm637, %v785, 0
        %1025 = vmatprep.subr.bf16.mxu0 %v994
        %1026 = vmatpush1.bf16.msra.mxu0 %v993
        %1027 = vmatprep.subr.bf16.mxu0 %v992
        %1028 = vmatpush1.bf16.msra.mxu0 %v991
        %1029 = vmatprep.subr.bf16.mxu0 %v990
        %1030 = vmatpush1.bf16.msra.mxu0 %v989
        %1031 = vmatprep.subr.bf16.mxu0 %v988
        %1032 = vmatpush1.bf16.msra.mxu0 %v987
        %1033 = vmatprep.subr.bf16.mxu0 %v986
        %1034 = vmatpush1.bf16.msra.mxu0 %v985
        %1035 = vmatprep.subr.bf16.mxu0 %v984
        %1036 = vmatpush1.bf16.msra.mxu0 %v983
        %1037 = vmatprep.subr.bf16.mxu0 %v982
        %1038 = vmatpush1.bf16.msra.mxu0 %v981
        %1039 = vmatprep.subr.bf16.mxu0 %v980
        %1040 = vmatpush1.bf16.msra.mxu0 %v979
        %1041 = vmatprep.subr.bf16.mxu0 0
        %1042 = vmatpush2.bf16.msra.mxu0 0
        %1043 = vmatprep.subr.bf16.mxu0 0
        %1044 = vmatpush2.bf16.msra.mxu0 0
        %1045 = vmatprep.subr.bf16.mxu0 0
        %1046 = vmatpush2.bf16.msra.mxu0 0
        %1047 = vmatprep.subr.bf16.mxu0 0
        %1048 = vmatpush2.bf16.msra.mxu0 0
        %1049 = vmatprep.subr.bf16.mxu0 0
        %1050 = vmatpush2.bf16.msra.mxu0 0
        %1051 = vmatprep.subr.bf16.mxu0 0
        %1052 = vmatpush2.bf16.msra.mxu0 0
        %1053 = vmatprep.subr.bf16.mxu0 %v998
        %1054 = vmatpush2.bf16.msra.mxu0 %v997
        %1055 = vmatprep.subr.bf16.mxu0 %v996
        %1056 = vmatpush2.bf16.msra.mxu0 %v995
        %1057 = vmatprep.mubr.bf16.mxu0 %v1020
        %1058 = vmatmul.mubr.bf16.gmra.mxu0 %v782
        %v1059 = vpop.f32.mrf.mxu0
        %v1060 = vadd.f32 0.0, %v1059
        %v1061 = vpop.f32.mrf.mxu0
        %v1062 = vadd.f32 0.0, %v1061
        %v1063 = vpop.f32.mrf.mxu0
        %v1064 = vadd.f32 0.0, %v1063
        %v1065 = vpop.f32.mrf.mxu0
        %v1066 = vadd.f32 0.0, %v1065
        %1067 = vmatprep.mubr.bf16.mxu0 %v1023
        %1068 = vmatmul.mubr.bf16.gmra.mxu0 %v784
        %v1069 = vpop.f32.mrf.mxu0
        %v1070 = vadd.f32 0.0, %v1069
        %v1071 = vpop.f32.mrf.mxu0
        %v1072 = vadd.f32 0.0, %v1071
        %v1073 = vpop.f32.mrf.mxu0
        %v1074 = vadd.f32 0.0, %v1073
        %v1075 = vpop.f32.mrf.mxu0
        %v1076 = vadd.f32 0.0, %v1075
        %1077 = vdwg.mxu0
        %s1078 = scalar_lea.vmem [#allocation8], 1
        %v1079 = vld [vmem:[%s1078] ss:$8 sm:$0x3]
        %v1081 = vlaneseq
        %v1082 = vshrl.u32 %v1081, 7
        %v1083 = vsub.s32 0, %v1082
        %v1084 = vrot.slane %v1079, %v1083
        %v1085 = vlaneseq
        %v1086 = vshrl.u32 %v1085, 7
        %v1087 = vsub.s32 1, %v1086
        %v1088 = vrot.slane %v1079, %v1087
        %v1091 = vmul.f32 %v1060, %v1084
        %v1092 = vmul.f32 %v1062, %v1088
        %v1093 = vmul.f32 %v1064, %v1084
        %v1094 = vmul.f32 %v1066, %v1088
        %v1095 = vmul.f32 %v1070, %v1084
        %v1096 = vmul.f32 %v1072, %v1088
        %v1097 = vmul.f32 %v1074, %v1084
        %v1098 = vmul.f32 %v1076, %v1088
        %v1099 = vadd.f32 %v717, %v1091
        %v1100 = vadd.f32 %v718, %v1092
        %v1101 = vadd.f32 %v719, %v1093
        %v1102 = vadd.f32 %v720, %v1094
        %v1103 = vadd.f32 %v721, %v1095
        %v1104 = vadd.f32 %v722, %v1096
        %v1105 = vadd.f32 %v723, %v1097
        %v1106 = vadd.f32 %v724, %v1098
        %s1107 = scalar_lea.vmem [#allocation6], 64
        %v1108 = vld [vmem:[%s1107] sm:$0xff]
        %v1109 = vld [vmem:[%s1107 + $0x8] sm:$0xff]
        %v1110 = vld [vmem:[%s1107 + $0x10] sm:$0xff]
        %v1111 = vld [vmem:[%s1107 + $0x18] sm:$0xff]
        %v1116 = vunpack.c.l.b16 %v1108
        %v1117 = vunpack.c.h.b16 %v1108
        %v1118 = vunpack.c.l.b16 %v1109
        %v1119 = vunpack.c.h.b16 %v1109
        %v1120 = vunpack.c.l.b16 %v1110
        %v1121 = vunpack.c.h.b16 %v1110
        %v1122 = vunpack.c.l.b16 %v1111
        %v1123 = vunpack.c.h.b16 %v1111
        %v1124 = vpack.c.b16 %v1118, %v1116
        %v1125 = vpack.c.b16 %v1119, %v1117
        %v1126 = vpack.c.b16 %v1122, %v1120
        %v1127 = vpack.c.b16 %v1123, %v1121
        %1130 = vrot.lane.b32.xlu0 %v888, 126
        %v1131 = vpop.permute.xlu0 %1130
        %1132 = vrot.lane.b32.xlu0 %v889, 126
        %v1133 = vpop.permute.xlu0 %1132
        %1134 = vrot.lane.b32.xlu0 %v890, 126
        %v1135 = vpop.permute.xlu0 %1134
        %1136 = vrot.lane.b32.xlu0 %v891, 126
        %v1137 = vpop.permute.xlu0 %1136
        %1138 = vrot.lane.b32.xlu0 %v892, 126
        %v1139 = vpop.permute.xlu0 %1138
        %1140 = vrot.lane.b32.xlu0 %v893, 126
        %v1141 = vpop.permute.xlu0 %1140
        %1142 = vrot.lane.b32.xlu0 %v894, 126
        %v1143 = vpop.permute.xlu0 %1142
        %1144 = vrot.lane.b32.xlu0 %v895, 126
        %v1145 = vpop.permute.xlu0 %1144
        %1146 = vrot.lane.b32.xlu0 %v896, 126
        %v1147 = vpop.permute.xlu0 %1146
        %1148 = vrot.lane.b32.xlu0 %v897, 126
        %v1149 = vpop.permute.xlu0 %1148
        %1150 = vrot.lane.b32.xlu0 %v898, 126
        %v1151 = vpop.permute.xlu0 %1150
        %1152 = vrot.lane.b32.xlu0 %v899, 126
        %v1153 = vpop.permute.xlu0 %1152
        %1154 = vrot.lane.b32.xlu0 %v900, 126
        %v1155 = vpop.permute.xlu0 %1154
        %1156 = vrot.lane.b32.xlu0 %v901, 126
        %v1157 = vpop.permute.xlu0 %1156
        %1158 = vrot.lane.b32.xlu0 %v902, 126
        %v1159 = vpop.permute.xlu0 %1158
        %1160 = vrot.lane.b32.xlu0 %v903, 126
        %v1161 = vpop.permute.xlu0 %1160
        %1162 = vrot.lane.b32.xlu0 %v904, 126
        %v1163 = vpop.permute.xlu0 %1162
        %1164 = vrot.lane.b32.xlu0 %v905, 126
        %v1165 = vpop.permute.xlu0 %1164
        %1166 = vrot.lane.b32.xlu0 %v906, 126
        %v1167 = vpop.permute.xlu0 %1166
        %1168 = vrot.lane.b32.xlu0 %v907, 126
        %v1169 = vpop.permute.xlu0 %1168
        %1170 = vrot.lane.b32.xlu0 %v908, 126
        %v1171 = vpop.permute.xlu0 %1170
        %1172 = vrot.lane.b32.xlu0 %v909, 126
        %v1173 = vpop.permute.xlu0 %1172
        %1174 = vrot.lane.b32.xlu0 %v910, 126
        %v1175 = vpop.permute.xlu0 %1174
        %1176 = vrot.lane.b32.xlu0 %v911, 126
        %v1177 = vpop.permute.xlu0 %1176
        %1178 = vrot.lane.b32.xlu0 %v912, 126
        %v1179 = vpop.permute.xlu0 %1178
        %1180 = vrot.lane.b32.xlu0 %v913, 126
        %v1181 = vpop.permute.xlu0 %1180
        %1182 = vrot.lane.b32.xlu0 %v914, 126
        %v1183 = vpop.permute.xlu0 %1182
        %1184 = vrot.lane.b32.xlu0 %v915, 126
        %v1185 = vpop.permute.xlu0 %1184
        %1186 = vrot.lane.b32.xlu0 %v916, 126
        %v1187 = vpop.permute.xlu0 %1186
        %1188 = vrot.lane.b32.xlu0 %v917, 126
        %v1189 = vpop.permute.xlu0 %1188
        %vm1190 = vcmask 1031168
        %v1191 = vsel %vm1190, %v1131, %v1133
        %v1192 = vsel %vm1190, %v1133, %v1135
        %v1193 = vsel %vm1190, %v1137, %v1139
        %v1194 = vsel %vm1190, %v1139, %v1141
        %v1195 = vsel %vm1190, %v1143, %v1145
        %v1196 = vsel %vm1190, %v1145, %v1147
        %v1197 = vsel %vm1190, %v1149, %v1151
        %v1198 = vsel %vm1190, %v1151, %v1153
        %v1199 = vsel %vm1190, %v1155, %v1157
        %v1200 = vsel %vm1190, %v1157, %v1159
        %v1201 = vsel %vm1190, %v1161, %v1163
        %v1202 = vsel %vm1190, %v1163, %v1165
        %v1203 = vsel %vm1190, %v1167, %v1169
        %v1204 = vsel %vm1190, %v1169, %v1171
        %v1205 = vsel %vm1190, %v1173, %v1175
        %v1206 = vsel %vm1190, %v1175, %v1177
        %v1207 = vsel %vm1190, %v1179, %v1181
        %v1208 = vsel %vm1190, %v1181, %v1183
        %v1209 = vsel %vm1190, %v1185, %v1187
        %v1210 = vsel %vm1190, %v1187, %v1189
        %v1232 = vsel %vm637, %v1125, 0
        %v1235 = vsel %vm637, %v1127, 0
        %1237 = vmatprep.subr.bf16.mxu0 %v1206
        %1238 = vmatpush1.bf16.msra.mxu0 %v1205
        %1239 = vmatprep.subr.bf16.mxu0 %v1204
        %1240 = vmatpush1.bf16.msra.mxu0 %v1203
        %1241 = vmatprep.subr.bf16.mxu0 %v1202
        %1242 = vmatpush1.bf16.msra.mxu0 %v1201
        %1243 = vmatprep.subr.bf16.mxu0 %v1200
        %1244 = vmatpush1.bf16.msra.mxu0 %v1199
        %1245 = vmatprep.subr.bf16.mxu0 %v1198
        %1246 = vmatpush1.bf16.msra.mxu0 %v1197
        %1247 = vmatprep.subr.bf16.mxu0 %v1196
        %1248 = vmatpush1.bf16.msra.mxu0 %v1195
        %1249 = vmatprep.subr.bf16.mxu0 %v1194
        %1250 = vmatpush1.bf16.msra.mxu0 %v1193
        %1251 = vmatprep.subr.bf16.mxu0 %v1192
        %1252 = vmatpush1.bf16.msra.mxu0 %v1191
        %1253 = vmatprep.subr.bf16.mxu0 0
        %1254 = vmatpush2.bf16.msra.mxu0 0
        %1255 = vmatprep.subr.bf16.mxu0 0
        %1256 = vmatpush2.bf16.msra.mxu0 0
        %1257 = vmatprep.subr.bf16.mxu0 0
        %1258 = vmatpush2.bf16.msra.mxu0 0
        %1259 = vmatprep.subr.bf16.mxu0 0
        %1260 = vmatpush2.bf16.msra.mxu0 0
        %1261 = vmatprep.subr.bf16.mxu0 0
        %1262 = vmatpush2.bf16.msra.mxu0 0
        %1263 = vmatprep.subr.bf16.mxu0 0
        %1264 = vmatpush2.bf16.msra.mxu0 0
        %1265 = vmatprep.subr.bf16.mxu0 %v1210
        %1266 = vmatpush2.bf16.msra.mxu0 %v1209
        %1267 = vmatprep.subr.bf16.mxu0 %v1208
        %1268 = vmatpush2.bf16.msra.mxu0 %v1207
        %1269 = vmatprep.mubr.bf16.mxu0 %v1232
        %1270 = vmatmul.mubr.bf16.gmra.mxu0 %v1124
        %v1271 = vpop.f32.mrf.mxu0
        %v1272 = vadd.f32 0.0, %v1271
        %v1273 = vpop.f32.mrf.mxu0
        %v1274 = vadd.f32 0.0, %v1273
        %v1275 = vpop.f32.mrf.mxu0
        %v1276 = vadd.f32 0.0, %v1275
        %v1277 = vpop.f32.mrf.mxu0
        %v1278 = vadd.f32 0.0, %v1277
        %1279 = vmatprep.mubr.bf16.mxu0 %v1235
        %1280 = vmatmul.mubr.bf16.gmra.mxu0 %v1126
        %v1281 = vpop.f32.mrf.mxu0
        %v1282 = vadd.f32 0.0, %v1281
        %v1283 = vpop.f32.mrf.mxu0
        %v1284 = vadd.f32 0.0, %v1283
        %v1285 = vpop.f32.mrf.mxu0
        %v1286 = vadd.f32 0.0, %v1285
        %v1287 = vpop.f32.mrf.mxu0
        %v1288 = vadd.f32 0.0, %v1287
        %1289 = vdwg.mxu0
        %v1290 = vadd.f32 %v1099, %v1272
        %v1291 = vadd.f32 %v1100, %v1274
        %v1292 = vadd.f32 %v1101, %v1276
        %v1293 = vadd.f32 %v1102, %v1278
        %v1294 = vadd.f32 %v1103, %v1282
        %v1295 = vadd.f32 %v1104, %v1284
        %v1296 = vadd.f32 %v1105, %v1286
        %v1297 = vadd.f32 %v1106, %v1288
        %s1298 = scalar_lea.vmem [#allocation6], 96
        %v1299 = vld [vmem:[%s1298] sm:$0xff]
        %v1300 = vld [vmem:[%s1298 + $0x8] sm:$0xff]
        %v1301 = vld [vmem:[%s1298 + $0x10] sm:$0xff]
        %v1302 = vld [vmem:[%s1298 + $0x18] sm:$0xff]
        %v1307 = vunpack.c.l.b16 %v1299
        %v1308 = vunpack.c.h.b16 %v1299
        %v1309 = vunpack.c.l.b16 %v1300
        %v1310 = vunpack.c.h.b16 %v1300
        %v1311 = vunpack.c.l.b16 %v1301
        %v1312 = vunpack.c.h.b16 %v1301
        %v1313 = vunpack.c.l.b16 %v1302
        %v1314 = vunpack.c.h.b16 %v1302
        %v1315 = vpack.c.b16 %v1309, %v1307
        %v1316 = vpack.c.b16 %v1310, %v1308
        %v1317 = vpack.c.b16 %v1313, %v1311
        %v1318 = vpack.c.b16 %v1314, %v1312
        %1321 = vrot.lane.b32.xlu0 %v888, 125
        %v1322 = vpop.permute.xlu0 %1321
        %1323 = vrot.lane.b32.xlu0 %v889, 125
        %v1324 = vpop.permute.xlu0 %1323
        %1325 = vrot.lane.b32.xlu0 %v890, 125
        %v1326 = vpop.permute.xlu0 %1325
        %1327 = vrot.lane.b32.xlu0 %v891, 125
        %v1328 = vpop.permute.xlu0 %1327
        %1329 = vrot.lane.b32.xlu0 %v892, 125
        %v1330 = vpop.permute.xlu0 %1329
        %1331 = vrot.lane.b32.xlu0 %v893, 125
        %v1332 = vpop.permute.xlu0 %1331
        %1333 = vrot.lane.b32.xlu0 %v894, 125
        %v1334 = vpop.permute.xlu0 %1333
        %1335 = vrot.lane.b32.xlu0 %v895, 125
        %v1336 = vpop.permute.xlu0 %1335
        %1337 = vrot.lane.b32.xlu0 %v896, 125
        %v1338 = vpop.permute.xlu0 %1337
        %1339 = vrot.lane.b32.xlu0 %v897, 125
        %v1340 = vpop.permute.xlu0 %1339
        %1341 = vrot.lane.b32.xlu0 %v898, 125
        %v1342 = vpop.permute.xlu0 %1341
        %1343 = vrot.lane.b32.xlu0 %v899, 125
        %v1344 = vpop.permute.xlu0 %1343
        %1345 = vrot.lane.b32.xlu0 %v900, 125
        %v1346 = vpop.permute.xlu0 %1345
        %1347 = vrot.lane.b32.xlu0 %v901, 125
        %v1348 = vpop.permute.xlu0 %1347
        %1349 = vrot.lane.b32.xlu0 %v902, 125
        %v1350 = vpop.permute.xlu0 %1349
        %1351 = vrot.lane.b32.xlu0 %v903, 125
        %v1352 = vpop.permute.xlu0 %1351
        %1353 = vrot.lane.b32.xlu0 %v904, 125
        %v1354 = vpop.permute.xlu0 %1353
        %1355 = vrot.lane.b32.xlu0 %v905, 125
        %v1356 = vpop.permute.xlu0 %1355
        %1357 = vrot.lane.b32.xlu0 %v906, 125
        %v1358 = vpop.permute.xlu0 %1357
        %1359 = vrot.lane.b32.xlu0 %v907, 125
        %v1360 = vpop.permute.xlu0 %1359
        %1361 = vrot.lane.b32.xlu0 %v908, 125
        %v1362 = vpop.permute.xlu0 %1361
        %1363 = vrot.lane.b32.xlu0 %v909, 125
        %v1364 = vpop.permute.xlu0 %1363
        %1365 = vrot.lane.b32.xlu0 %v910, 125
        %v1366 = vpop.permute.xlu0 %1365
        %1367 = vrot.lane.b32.xlu0 %v911, 125
        %v1368 = vpop.permute.xlu0 %1367
        %1369 = vrot.lane.b32.xlu0 %v912, 125
        %v1370 = vpop.permute.xlu0 %1369
        %1371 = vrot.lane.b32.xlu0 %v913, 125
        %v1372 = vpop.permute.xlu0 %1371
        %1373 = vrot.lane.b32.xlu0 %v914, 125
        %v1374 = vpop.permute.xlu0 %1373
        %1375 = vrot.lane.b32.xlu0 %v915, 125
        %v1376 = vpop.permute.xlu0 %1375
        %1377 = vrot.lane.b32.xlu0 %v916, 125
        %v1378 = vpop.permute.xlu0 %1377
        %1379 = vrot.lane.b32.xlu0 %v917, 125
        %v1380 = vpop.permute.xlu0 %1379
        %vm1381 = vcmask 1022976
        %v1382 = vsel %vm1381, %v1322, %v1324
        %v1383 = vsel %vm1381, %v1324, %v1326
        %v1384 = vsel %vm1381, %v1328, %v1330
        %v1385 = vsel %vm1381, %v1330, %v1332
        %v1386 = vsel %vm1381, %v1334, %v1336
        %v1387 = vsel %vm1381, %v1336, %v1338
        %v1388 = vsel %vm1381, %v1340, %v1342
        %v1389 = vsel %vm1381, %v1342, %v1344
        %v1390 = vsel %vm1381, %v1346, %v1348
        %v1391 = vsel %vm1381, %v1348, %v1350
        %v1392 = vsel %vm1381, %v1352, %v1354
        %v1393 = vsel %vm1381, %v1354, %v1356
        %v1394 = vsel %vm1381, %v1358, %v1360
        %v1395 = vsel %vm1381, %v1360, %v1362
        %v1396 = vsel %vm1381, %v1364, %v1366
        %v1397 = vsel %vm1381, %v1366, %v1368
        %v1398 = vsel %vm1381, %v1370, %v1372
        %v1399 = vsel %vm1381, %v1372, %v1374
        %v1400 = vsel %vm1381, %v1376, %v1378
        %v1401 = vsel %vm1381, %v1378, %v1380
        %v1423 = vsel %vm637, %v1316, 0
        %v1426 = vsel %vm637, %v1318, 0
        %1428 = vmatprep.subr.bf16.mxu0 %v1397
        %1429 = vmatpush1.bf16.msra.mxu0 %v1396
        %1430 = vmatprep.subr.bf16.mxu0 %v1395
        %1431 = vmatpush1.bf16.msra.mxu0 %v1394
        %1432 = vmatprep.subr.bf16.mxu0 %v1393
        %1433 = vmatpush1.bf16.msra.mxu0 %v1392
        %1434 = vmatprep.subr.bf16.mxu0 %v1391
        %1435 = vmatpush1.bf16.msra.mxu0 %v1390
        %1436 = vmatprep.subr.bf16.mxu0 %v1389
        %1437 = vmatpush1.bf16.msra.mxu0 %v1388
        %1438 = vmatprep.subr.bf16.mxu0 %v1387
        %1439 = vmatpush1.bf16.msra.mxu0 %v1386
        %1440 = vmatprep.subr.bf16.mxu0 %v1385
        %1441 = vmatpush1.bf16.msra.mxu0 %v1384
        %1442 = vmatprep.subr.bf16.mxu0 %v1383
        %1443 = vmatpush1.bf16.msra.mxu0 %v1382
        %1444 = vmatprep.subr.bf16.mxu0 0
        %1445 = vmatpush2.bf16.msra.mxu0 0
        %1446 = vmatprep.subr.bf16.mxu0 0
        %1447 = vmatpush2.bf16.msra.mxu0 0
        %1448 = vmatprep.subr.bf16.mxu0 0
        %1449 = vmatpush2.bf16.msra.mxu0 0
        %1450 = vmatprep.subr.bf16.mxu0 0
        %1451 = vmatpush2.bf16.msra.mxu0 0
        %1452 = vmatprep.subr.bf16.mxu0 0
        %1453 = vmatpush2.bf16.msra.mxu0 0
        %1454 = vmatprep.subr.bf16.mxu0 0
        %1455 = vmatpush2.bf16.msra.mxu0 0
        %1456 = vmatprep.subr.bf16.mxu0 %v1401
        %1457 = vmatpush2.bf16.msra.mxu0 %v1400
        %1458 = vmatprep.subr.bf16.mxu0 %v1399
        %1459 = vmatpush2.bf16.msra.mxu0 %v1398
        %1460 = vmatprep.mubr.bf16.mxu0 %v1423
        %1461 = vmatmul.mubr.bf16.gmra.mxu0 %v1315
        %v1462 = vpop.f32.mrf.mxu0
        %v1463 = vadd.f32 0.0, %v1462
        %v1464 = vpop.f32.mrf.mxu0
        %v1465 = vadd.f32 0.0, %v1464
        %v1466 = vpop.f32.mrf.mxu0
        %v1467 = vadd.f32 0.0, %v1466
        %v1468 = vpop.f32.mrf.mxu0
        %v1469 = vadd.f32 0.0, %v1468
        %1470 = vmatprep.mubr.bf16.mxu0 %v1426
        %1471 = vmatmul.mubr.bf16.gmra.mxu0 %v1317
        %v1472 = vpop.f32.mrf.mxu0
        %v1473 = vadd.f32 0.0, %v1472
        %v1474 = vpop.f32.mrf.mxu0
        %v1475 = vadd.f32 0.0, %v1474
        %v1476 = vpop.f32.mrf.mxu0
        %v1477 = vadd.f32 0.0, %v1476
        %v1478 = vpop.f32.mrf.mxu0
        %v1479 = vadd.f32 0.0, %v1478
        %1480 = vdwg.mxu0
        %s1481 = scalar_lea.vmem [#allocation8], 3
        %v1482 = vld [vmem:[%s1481] ss:$8 sm:$0x3]
        %v1484 = vlaneseq
        %v1485 = vshrl.u32 %v1484, 7
        %v1486 = vsub.s32 0, %v1485
        %v1487 = vrot.slane %v1482, %v1486
        %v1488 = vlaneseq
        %v1489 = vshrl.u32 %v1488, 7
        %v1490 = vsub.s32 1, %v1489
        %v1491 = vrot.slane %v1482, %v1490
        %v1494 = vmul.f32 %v1463, %v1487
        %v1495 = vmul.f32 %v1465, %v1491
        %v1496 = vmul.f32 %v1467, %v1487
        %v1497 = vmul.f32 %v1469, %v1491
        %v1498 = vmul.f32 %v1473, %v1487
        %v1499 = vmul.f32 %v1475, %v1491
        %v1500 = vmul.f32 %v1477, %v1487
        %v1501 = vmul.f32 %v1479, %v1491
        %v1502 = vadd.f32 %v1290, %v1494
        %v1503 = vadd.f32 %v1291, %v1495
        %v1504 = vadd.f32 %v1292, %v1496
        %v1505 = vadd.f32 %v1293, %v1497
        %v1506 = vadd.f32 %v1294, %v1498
        %v1507 = vadd.f32 %v1295, %v1499
        %v1508 = vadd.f32 %v1296, %v1500
        %v1509 = vadd.f32 %v1297, %v1501
        %s1510 = scalar_lea.vmem [#allocation6], 128
        %v1511 = vld [vmem:[%s1510] sm:$0xff]
        %v1512 = vld [vmem:[%s1510 + $0x8] sm:$0xff]
        %v1513 = vld [vmem:[%s1510 + $0x10] sm:$0xff]
        %v1514 = vld [vmem:[%s1510 + $0x18] sm:$0xff]
        %v1519 = vunpack.c.l.b16 %v1511
        %v1520 = vunpack.c.h.b16 %v1511
        %v1521 = vunpack.c.l.b16 %v1512
        %v1522 = vunpack.c.h.b16 %v1512
        %v1523 = vunpack.c.l.b16 %v1513
        %v1524 = vunpack.c.h.b16 %v1513
        %v1525 = vunpack.c.l.b16 %v1514
        %v1526 = vunpack.c.h.b16 %v1514
        %v1527 = vpack.c.b16 %v1521, %v1519
        %v1528 = vpack.c.b16 %v1522, %v1520
        %v1529 = vpack.c.b16 %v1525, %v1523
        %v1530 = vpack.c.b16 %v1526, %v1524
        %1533 = vrot.lane.b32.xlu0 %v888, 124
        %v1534 = vpop.permute.xlu0 %1533
        %1535 = vrot.lane.b32.xlu0 %v889, 124
        %v1536 = vpop.permute.xlu0 %1535
        %1537 = vrot.lane.b32.xlu0 %v890, 124
        %v1538 = vpop.permute.xlu0 %1537
        %1539 = vrot.lane.b32.xlu0 %v891, 124
        %v1540 = vpop.permute.xlu0 %1539
        %1541 = vrot.lane.b32.xlu0 %v892, 124
        %v1542 = vpop.permute.xlu0 %1541
        %1543 = vrot.lane.b32.xlu0 %v893, 124
        %v1544 = vpop.permute.xlu0 %1543
        %1545 = vrot.lane.b32.xlu0 %v894, 124
        %v1546 = vpop.permute.xlu0 %1545
        %1547 = vrot.lane.b32.xlu0 %v895, 124
        %v1548 = vpop.permute.xlu0 %1547
        %1549 = vrot.lane.b32.xlu0 %v896, 124
        %v1550 = vpop.permute.xlu0 %1549
        %1551 = vrot.lane.b32.xlu0 %v897, 124
        %v1552 = vpop.permute.xlu0 %1551
        %1553 = vrot.lane.b32.xlu0 %v898, 124
        %v1554 = vpop.permute.xlu0 %1553
        %1555 = vrot.lane.b32.xlu0 %v899, 124
        %v1556 = vpop.permute.xlu0 %1555
        %1557 = vrot.lane.b32.xlu0 %v900, 124
        %v1558 = vpop.permute.xlu0 %1557
        %1559 = vrot.lane.b32.xlu0 %v901, 124
        %v1560 = vpop.permute.xlu0 %1559
        %1561 = vrot.lane.b32.xlu0 %v902, 124
        %v1562 = vpop.permute.xlu0 %1561
        %1563 = vrot.lane.b32.xlu0 %v903, 124
        %v1564 = vpop.permute.xlu0 %1563
        %1565 = vrot.lane.b32.xlu0 %v904, 124
        %v1566 = vpop.permute.xlu0 %1565
        %1567 = vrot.lane.b32.xlu0 %v905, 124
        %v1568 = vpop.permute.xlu0 %1567
        %1569 = vrot.lane.b32.xlu0 %v906, 124
        %v1570 = vpop.permute.xlu0 %1569
        %1571 = vrot.lane.b32.xlu0 %v907, 124
        %v1572 = vpop.permute.xlu0 %1571
        %1573 = vrot.lane.b32.xlu0 %v908, 124
        %v1574 = vpop.permute.xlu0 %1573
        %1575 = vrot.lane.b32.xlu0 %v909, 124
        %v1576 = vpop.permute.xlu0 %1575
        %1577 = vrot.lane.b32.xlu0 %v910, 124
        %v1578 = vpop.permute.xlu0 %1577
        %1579 = vrot.lane.b32.xlu0 %v911, 124
        %v1580 = vpop.permute.xlu0 %1579
        %1581 = vrot.lane.b32.xlu0 %v912, 124
        %v1582 = vpop.permute.xlu0 %1581
        %1583 = vrot.lane.b32.xlu0 %v913, 124
        %v1584 = vpop.permute.xlu0 %1583
        %1585 = vrot.lane.b32.xlu0 %v914, 124
        %v1586 = vpop.permute.xlu0 %1585
        %1587 = vrot.lane.b32.xlu0 %v915, 124
        %v1588 = vpop.permute.xlu0 %1587
        %1589 = vrot.lane.b32.xlu0 %v916, 124
        %v1590 = vpop.permute.xlu0 %1589
        %1591 = vrot.lane.b32.xlu0 %v917, 124
        %v1592 = vpop.permute.xlu0 %1591
        %vm1593 = vcmask 1014784
        %v1594 = vsel %vm1593, %v1534, %v1536
        %v1595 = vsel %vm1593, %v1536, %v1538
        %v1596 = vsel %vm1593, %v1540, %v1542
        %v1597 = vsel %vm1593, %v1542, %v1544
        %v1598 = vsel %vm1593, %v1546, %v1548
        %v1599 = vsel %vm1593, %v1548, %v1550
        %v1600 = vsel %vm1593, %v1552, %v1554
        %v1601 = vsel %vm1593, %v1554, %v1556
        %v1602 = vsel %vm1593, %v1558, %v1560
        %v1603 = vsel %vm1593, %v1560, %v1562
        %v1604 = vsel %vm1593, %v1564, %v1566
        %v1605 = vsel %vm1593, %v1566, %v1568
        %v1606 = vsel %vm1593, %v1570, %v1572
        %v1607 = vsel %vm1593, %v1572, %v1574
        %v1608 = vsel %vm1593, %v1576, %v1578
        %v1609 = vsel %vm1593, %v1578, %v1580
        %v1610 = vsel %vm1593, %v1582, %v1584
        %v1611 = vsel %vm1593, %v1584, %v1586
        %v1612 = vsel %vm1593, %v1588, %v1590
        %v1613 = vsel %vm1593, %v1590, %v1592
        %v1635 = vsel %vm637, %v1528, 0
        %v1638 = vsel %vm637, %v1530, 0
        %1640 = vmatprep.subr.bf16.mxu0 %v1609
        %1641 = vmatpush1.bf16.msra.mxu0 %v1608
        %1642 = vmatprep.subr.bf16.mxu0 %v1607
        %1643 = vmatpush1.bf16.msra.mxu0 %v1606
        %1644 = vmatprep.subr.bf16.mxu0 %v1605
        %1645 = vmatpush1.bf16.msra.mxu0 %v1604
        %1646 = vmatprep.subr.bf16.mxu0 %v1603
        %1647 = vmatpush1.bf16.msra.mxu0 %v1602
        %1648 = vmatprep.subr.bf16.mxu0 %v1601
        %1649 = vmatpush1.bf16.msra.mxu0 %v1600
        %1650 = vmatprep.subr.bf16.mxu0 %v1599
        %1651 = vmatpush1.bf16.msra.mxu0 %v1598
        %1652 = vmatprep.subr.bf16.mxu0 %v1597
        %1653 = vmatpush1.bf16.msra.mxu0 %v1596
        %1654 = vmatprep.subr.bf16.mxu0 %v1595
        %1655 = vmatpush1.bf16.msra.mxu0 %v1594
        %1656 = vmatprep.subr.bf16.mxu0 0
        %1657 = vmatpush2.bf16.msra.mxu0 0
        %1658 = vmatprep.subr.bf16.mxu0 0
        %1659 = vmatpush2.bf16.msra.mxu0 0
        %1660 = vmatprep.subr.bf16.mxu0 0
        %1661 = vmatpush2.bf16.msra.mxu0 0
        %1662 = vmatprep.subr.bf16.mxu0 0
        %1663 = vmatpush2.bf16.msra.mxu0 0
        %1664 = vmatprep.subr.bf16.mxu0 0
        %1665 = vmatpush2.bf16.msra.mxu0 0
        %1666 = vmatprep.subr.bf16.mxu0 0
        %1667 = vmatpush2.bf16.msra.mxu0 0
        %1668 = vmatprep.subr.bf16.mxu0 %v1613
        %1669 = vmatpush2.bf16.msra.mxu0 %v1612
        %1670 = vmatprep.subr.bf16.mxu0 %v1611
        %1671 = vmatpush2.bf16.msra.mxu0 %v1610
        %1672 = vmatprep.mubr.bf16.mxu0 %v1635
        %1673 = vmatmul.mubr.bf16.gmra.mxu0 %v1527
        %v1674 = vpop.f32.mrf.mxu0
        %v1675 = vadd.f32 0.0, %v1674
        %v1676 = vpop.f32.mrf.mxu0
        %v1677 = vadd.f32 0.0, %v1676
        %v1678 = vpop.f32.mrf.mxu0
        %v1679 = vadd.f32 0.0, %v1678
        %v1680 = vpop.f32.mrf.mxu0
        %v1681 = vadd.f32 0.0, %v1680
        %1682 = vmatprep.mubr.bf16.mxu0 %v1638
        %1683 = vmatmul.mubr.bf16.gmra.mxu0 %v1529
        %v1684 = vpop.f32.mrf.mxu0
        %v1685 = vadd.f32 0.0, %v1684
        %v1686 = vpop.f32.mrf.mxu0
        %v1687 = vadd.f32 0.0, %v1686
        %v1688 = vpop.f32.mrf.mxu0
        %v1689 = vadd.f32 0.0, %v1688
        %v1690 = vpop.f32.mrf.mxu0
        %v1691 = vadd.f32 0.0, %v1690
        %1692 = vdwg.mxu0
        %s1693 = scalar_lea.vmem [#allocation8], 4
        %v1694 = vld [vmem:[%s1693] ss:$8 sm:$0x3]
        %v1696 = vlaneseq
        %v1697 = vshrl.u32 %v1696, 7
        %v1698 = vsub.s32 0, %v1697
        %v1699 = vrot.slane %v1694, %v1698
        %v1700 = vlaneseq
        %v1701 = vshrl.u32 %v1700, 7
        %v1702 = vsub.s32 1, %v1701
        %v1703 = vrot.slane %v1694, %v1702
        %v1706 = vmul.f32 %v1675, %v1699
        %v1707 = vmul.f32 %v1677, %v1703
        %v1708 = vmul.f32 %v1679, %v1699
        %v1709 = vmul.f32 %v1681, %v1703
        %v1710 = vmul.f32 %v1685, %v1699
        %v1711 = vmul.f32 %v1687, %v1703
        %v1712 = vmul.f32 %v1689, %v1699
        %v1713 = vmul.f32 %v1691, %v1703
        %v1714 = vadd.f32 %v1502, %v1706
        %v1715 = vadd.f32 %v1503, %v1707
        %v1716 = vadd.f32 %v1504, %v1708
        %v1717 = vadd.f32 %v1505, %v1709
        %v1718 = vadd.f32 %v1506, %v1710
        %v1719 = vadd.f32 %v1507, %v1711
        %v1720 = vadd.f32 %v1508, %v1712
        %v1721 = vadd.f32 %v1509, %v1713
        %v1722 = vmax.f32 %v1714, 0.0
        %v1723 = vmax.f32 %v1715, 0.0
        %v1724 = vmax.f32 %v1716, 0.0
        %v1725 = vmax.f32 %v1717, 0.0
        %v1726 = vmax.f32 %v1718, 0.0
        %v1727 = vmax.f32 %v1719, 0.0
        %v1728 = vmax.f32 %v1720, 0.0
        %v1729 = vmax.f32 %v1721, 0.0
        %v1730 = vpack.c.bf16 %v1724, %v1722
        %v1731 = vpack.c.bf16 %v1725, %v1723
        %v1732 = vpack.c.bf16 %v1728, %v1726
        %v1733 = vpack.c.bf16 %v1729, %v1727
        %v1738 = vunpack.c.l.b16 %v1730
        %v1739 = vunpack.c.l.b16 %v1731
        %v1740 = vunpack.c.h.b16 %v1730
        %v1741 = vunpack.c.h.b16 %v1731
        %v1742 = vunpack.c.l.b16 %v1732
        %v1743 = vunpack.c.l.b16 %v1733
        %v1744 = vunpack.c.h.b16 %v1732
        %v1745 = vunpack.c.h.b16 %v1733
        %v1746 = vpack.c.b16 %v1739, %v1738
        %v1747 = vpack.c.b16 %v1741, %v1740
        %v1748 = vpack.c.b16 %v1743, %v1742
        %v1749 = vpack.c.b16 %v1745, %v1744
        %1754 = vst [vmem:[%s215] sm:$0xff] %v1746
        %1755 = vst [vmem:[%s215 + $0x8] sm:$0xff] %v1747
        %1756 = vst [vmem:[%s215 + $0x10] sm:$0xff] %v1748
        %1757 = vst [vmem:[%s215 + $0x18] sm:$0xff] %v1749
        %s1758 = sand.u32 %s97, 1
        %s1759 = scalar_lea.sflag [#allocation5], %s1758
        %s1760 = sand.u32 %s97, 1
        %s1761 = smul.addr %s1760, 32
        %s1762 = scalar_lea.vmem [#allocation9], %s1761
        // Predicated region
        $region45: #{tpu_custom_call.1} parent=31 // pred_check
          %p1763 = pneg %p107
        $region46: #{tpu_custom_call.1} parent=31 // pred_check_branch
          %1765 = sbr.rel (%p1763) target = $region48
        $region47: #{tpu_custom_call.1} parent=31 // pred_region
          %s1767 = ssub.s32 512, 512
          %1768 = vsyncadd %s1759, %s1767
          %s1769 = smul.addr %s21, 8
          %s1770 = smul.addr %s1769, 64
          %s1771 = scalar_lea.hbm %s3, %s1770
          %s1772 = sshll.u32 %s1762, 4
          %s1773 = int_to_ptr.vmem [resolvable:$true] %s1772
          %1778 = dma.vmem_to_hbm [thread:$0]  %s1773, 512, %s1771, %s1759, 128, 128, 8
        $region48: #{tpu_custom_call.1} parent=31 // pred_fallthru
          _
      $region32: #{tpu_custom_call.1} parent=5 // pred_fallthru
        _
      %p1779 = scmp.le.s32.totalorder 2, %s16
      // Predicated region
      $region49: #{tpu_custom_call.1} parent=5 // pred_check
        %p1780 = pneg %p1779
      $region50: #{tpu_custom_call.1} parent=5 // pred_check_branch
        %1782 = sbr.rel (%p1780) target = $region52
      $region51: #{tpu_custom_call.1} parent=5 // pred_region
        %s1783 = ssub.s32 %s16, 2
        // Predicated region
        $region53: #{tpu_custom_call.1} parent=51 // pred_check
          %p1784 = pneg %p113
        $region54: #{tpu_custom_call.1} parent=51 // pred_check_branch
          %1786 = sbr.rel (%p1784) target = $region56
        $region55: #{tpu_custom_call.1} parent=51 // pred_region
          %s1787 = sand.u32 %s98, 1
          %s1788 = scalar_lea.sflag [#allocation5], %s1787
          %s1789 = sand.u32 %s98, 1
          %s1790 = smul.addr %s1789, 32
          %s1791 = scalar_lea.vmem [#allocation9], %s1790
          %1792 = dma.done %s1788, 512
        $region56: #{tpu_custom_call.1} parent=51 // pred_fallthru
          _
      $region52: #{tpu_custom_call.1} parent=5 // pred_fallthru
        _
    $region6: #{tpu_custom_call.1} parent=1 // loop_footer
      %s20 = sadd.s32 1, %s16
    $region7: #{tpu_custom_call.1} parent=1 // loop_footer_branch
      %15 = sbr.rel target = $region3
    $region8: #{tpu_custom_call.1} parent=1 // loop_exit
      _
    %1793 = vsyncpa [#allocation4], 1
    %s1794 = scalar_lea.sflag [#allocation4], 1
    %1795 = vsyncpa %s1794, 1
    %1796 = vsyncpa [#allocation7], 1
    %1797 = vsyncpa [#allocation5], 1
    %s1798 = scalar_lea.sflag [#allocation5], 1
    %1799 = vsyncpa %s1798, 1

</llo_original>
